<compile_context>
chip_gen: v5e
topology: v5e:2x2
jax: 0.10.0
libtpu: 0.0.40
codegen_flags: <defaults>
</compile_context>

<pallas_src>
import jax
import jax.numpy as jnp
from jax.experimental import pallas as pl
from jax.experimental.pallas import tpu as pltpu


def _round_up(n, m):
    return ((n + m - 1) // m) * m


# ----------------------------- Pallas kernel -------------------------------
def gesture_kernel(x_ref,
                   w1_ref, b1_ref,
                   w2_ref, b2_ref,
                   w3_ref, b3_ref,
                   wf_ref, bf_ref,
                   o_ref):
    # x tile: (TB, 504) f32 straight from HBM; cast to bf16 in-kernel.
    # Weights bf16 (in, out) layout; biases f32 (1, out).  Dots accumulate in
    # f32; bias-add + ReLU stay f32 (v5e-safe); activations re-cast to bf16
    # only where they feed the next MXU pass.
    x = x_ref[...].astype(jnp.bfloat16)

    # layer 1: Linear(504->512) + folded BN + ReLU   (K = 504, unaligned OK)
    h = jnp.dot(x, w1_ref[...], preferred_element_type=jnp.float32) + b1_ref[...]
    h = jnp.maximum(h, 0.0).astype(jnp.bfloat16)

    # layer 2: Linear(512->128) + folded BN + ReLU
    h = jnp.dot(h, w2_ref[...], preferred_element_type=jnp.float32) + b2_ref[...]
    h = jnp.maximum(h, 0.0).astype(jnp.bfloat16)

    # layer 3: Linear(128->64) + folded BN + ReLU    (N padded 64 -> 128, zeros)
    h = jnp.dot(h, w3_ref[...], preferred_element_type=jnp.float32) + b3_ref[...]
    h = jnp.maximum(h, 0.0).astype(jnp.bfloat16)

    # final fc: Linear(64->5)                        (N padded 5 -> 128, zeros)
    out = jnp.dot(h, wf_ref[...], preferred_element_type=jnp.float32) + bf_ref[...]
    # bf16 writeback halves the padded output's HBM traffic (v6e is the
    # closest to the memory roofline); accuracy is already bf16-bounded.
    o_ref[...] = out.astype(jnp.bfloat16)


# ------------------------------ parameters ---------------------------------
def _linear_init(key, in_dim, out_dim):
    """Deterministic init mimicking torch.nn.Linear (uniform +-1/sqrt(in))."""
    kw, kb = jax.random.split(key)
    bound = 1.0 / jnp.sqrt(jnp.float32(in_dim))
    w = jax.random.uniform(kw, (out_dim, in_dim), jnp.float32, -bound, bound)
    b = jax.random.uniform(kb, (out_dim,), jnp.float32, -bound, bound)
    return w, b


def _bn_init(key, dim):
    kg, kb, km, kv = jax.random.split(key, 4)
    gamma = 1.0 + 0.1 * jax.random.normal(kg, (dim,), jnp.float32)
    beta = 0.1 * jax.random.normal(kb, (dim,), jnp.float32)
    running_mean = 0.1 * jax.random.normal(km, (dim,), jnp.float32)
    running_var = jnp.abs(1.0 + 0.1 * jax.random.normal(kv, (dim,), jnp.float32))
    return gamma, beta, running_mean, running_var


def make_params(frames, key):
    d_in = frames * 21 * 3
    keys = jax.random.split(key, 7)
    params = {}
    params["fc1"] = _linear_init(keys[0], d_in, 512)
    params["bn1"] = _bn_init(keys[1], 512)
    params["fc2"] = _linear_init(keys[2], 512, 128)
    params["bn2"] = _bn_init(keys[3], 128)
    params["fc3"] = _linear_init(keys[4], 128, 64)
    params["bn3"] = _bn_init(keys[5], 64)
    params["fc"] = _linear_init(keys[6], 64, 5)
    return params


def _fold_bn(w, b, bn, eps=1e-5):
    """Fold eval-mode BatchNorm1d into the preceding Linear.

    y = gamma * (x@W^T + b - mean) / sqrt(var + eps) + beta
      = x @ (W*scale)^T + (b*scale + shift)
    """
    gamma, beta, mean, var = bn
    scale = gamma / jnp.sqrt(var + eps)           # (out,)
    shift = beta - mean * scale                   # (out,)
    w_eff = w * scale[:, None]                    # (out, in)
    b_eff = b * scale + shift                     # (out,)
    return w_eff, b_eff


def prepare_params(params, eps=1e-5):
    """One-time setup: fold BN, transpose to (in, out), zero-pad only the
    output-side lane dims, cast weights to bf16.  Keep the returned pytree
    device-resident; this stays off the per-call hot path."""
    w1, b1 = _fold_bn(*params["fc1"], params["bn1"], eps)
    w2, b2 = _fold_bn(*params["fc2"], params["bn2"], eps)
    w3, b3 = _fold_bn(*params["fc3"], params["bn3"], eps)
    wf, bf = params["fc"]

    d3_pad = _round_up(w3.shape[0], 128)     # 64 -> 128
    d_out = wf.shape[0]                      # 5
    d_out_pad = _round_up(d_out, 128)        # 5 -> 128

    def pad_w(w, in_pad, out_pad):
        # torch (out, in) -> kernel (in_pad, out_pad), zero-padded, bf16.
        wt = jnp.zeros((in_pad, out_pad), jnp.float32)
        wt = wt.at[:w.shape[1], :w.shape[0]].set(w.T)
        return wt.astype(jnp.bfloat16)

    def pad_b(b, out_pad):
        bp = jnp.zeros((1, out_pad), jnp.float32)
        return bp.at[0, :b.shape[0]].set(b)

    d_in = w1.shape[1]                       # 504 — kept unpadded (K dim)
    return {
        "w1": pad_w(w1, d_in, 512),          "b1": pad_b(b1, 512),
        "w2": pad_w(w2, 512, 128),           "b2": pad_b(b2, 128),
        "w3": pad_w(w3, 128, d3_pad),        "b3": pad_b(b3, d3_pad),
        "wf": pad_w(wf, d3_pad, d_out_pad),  "bf": pad_b(bf, d_out_pad),
        "d_out": d_out,
    }


# -------------------------------- wrapper -----------------------------------
def _choose_tb(B, block_b):
    """Batch tile: multiple of 16 (bf16 sublane packing), at most block_b, and
    small enough that the grid has >= 2 steps so v7x's two TensorCores both get
    work (single-TC v5e/v6e are unaffected)."""
    half = _round_up(pl.cdiv(B, 2), 16)
    return max(16, min(block_b, half))


def gesture_detector(x, prep, *, block_b=512):
    """x: (B, frames, 21, 3) float32  ->  (B, 5) float32."""
    B = x.shape[0]
    xf = x.reshape(B, -1).astype(jnp.float32)     # == torch x.view(B, -1)
    d_in = xf.shape[1]                            # 504

    n1 = prep["w1"].shape[1]
    n2 = prep["w2"].shape[1]
    n3 = prep["w3"].shape[1]
    d_out_pad = prep["wf"].shape[1]
    d_out = prep["d_out"]

    # Batch tiling: big tiles amortize per-step overhead; >= 2 grid steps for
    # v7x megacore sharding.
    tb = _choose_tb(B, block_b)
    b_pad = max(_round_up(B, tb), 2 * tb)
    if b_pad != B:
        # Zero-pad only the batch axis (kept f32; feature pad & bf16 cast now
        # happen in-kernel).  No copy at all when B is already a tile multiple.
        xf = jnp.pad(xf, ((0, b_pad - B), (0, 0)))

    args = (xf,
            prep["w1"], prep["b1"],
            prep["w2"], prep["b2"],
            prep["w3"], prep["b3"],
            prep["wf"], prep["bf"])

    # x / out tiles move with the batch grid; weights & biases use constant
    # index_maps so they are fetched once and stay VMEM-resident.
    x_spec = pl.BlockSpec((tb, d_in), lambda i: (i, 0))
    out_spec = pl.BlockSpec((tb, d_out_pad), lambda i: (i, 0))

    def const_spec(a):
        zeros = (0,) * a.ndim
        return pl.BlockSpec(tuple(a.shape), lambda i: zeros)

    in_specs = [x_spec] + [const_spec(a) for a in args[1:]]

    flops = 2 * b_pad * (d_in * n1 + n1 * n2 + n2 * n3 + n3 * d_out_pad)
    bytes_accessed = (b_pad * d_in * 4
                      + sum(int(a.size) * a.dtype.itemsize for a in args[1:])
                      + b_pad * d_out_pad * 2)

    out = pl.pallas_call(
        gesture_kernel,
        out_shape=jax.ShapeDtypeStruct((b_pad, d_out_pad), jnp.bfloat16),
        grid=(b_pad // tb,),
        in_specs=in_specs,
        out_specs=out_spec,
        compiler_params=pltpu.CompilerParams(
            dimension_semantics=("parallel",)),
        cost_estimate=pl.CostEstimate(
            flops=flops, transcendentals=0, bytes_accessed=bytes_accessed),
    )(*args)

    # Drop batch / output padding, restore f32 (trivial XLA ops outside kernel).
    return out[:B, :d_out].astype(jnp.float32)


# ------------------------------ reference -----------------------------------
def gesture_detector_ref(x, params):
    B = x.shape[0]
    h = x.reshape(B, -1).astype(jnp.float32)
    for fc, bn in (("fc1", "bn1"), ("fc2", "bn2"), ("fc3", "bn3")):
        w, b = params[fc]
        gamma, beta, mean, var = params[bn]
        h = h @ w.T + b
        h = gamma * (h - mean) / jnp.sqrt(var + 1e-5) + beta
        h = jnp.maximum(h, 0.0)
    wf, bf = params["fc"]
    return h @ wf.T + bf


# ---------------------------------- main -------------------------------------
if __name__ == "__main__":
    frames = 8
    batch = 4
    key = jax.random.PRNGKey(0)
    kx, kp = jax.random.split(key)

    x = jax.random.normal(kx, (batch, frames, 21, 3), jnp.float32)
    params = make_params(frames, kp)
    prep = prepare_params(params)        # one-time: fold BN, transpose, pad, bf16

    out = gesture_detector(x, prep)
    out = jax.block_until_ready(out)

    ref = gesture_detector_ref(x, params)
    assert out.shape == (batch, 5), out.shape
    # bf16 weights/activations/output with f32 accumulation -> loosened tol.
    assert jnp.allclose(out, ref, atol=5e-2, rtol=5e-2), (
        float(jnp.max(jnp.abs(out - ref))))

    print("KERNEL_OK")
</pallas_src>

<mosaic_0001>
module attributes {stable_mosaic.version = 11 : i64} {
  func.func @gesture_kernel(%arg0: i32, %arg1: memref<16x504xf32, #tpu.memory_space<vmem>>, %arg2: memref<504x512xbf16, #tpu.memory_space<vmem>>, %arg3: memref<1x512xf32, #tpu.memory_space<vmem>>, %arg4: memref<512x128xbf16, #tpu.memory_space<vmem>>, %arg5: memref<1x128xf32, #tpu.memory_space<vmem>>, %arg6: memref<128x128xbf16, #tpu.memory_space<vmem>>, %arg7: memref<1x128xf32, #tpu.memory_space<vmem>>, %arg8: memref<128x128xbf16, #tpu.memory_space<vmem>>, %arg9: memref<1x128xf32, #tpu.memory_space<vmem>>, %arg10: memref<16x128xbf16, #tpu.memory_space<vmem>>) attributes {dimension_semantics = [#tpu.dimension_semantics<parallel>], iteration_bounds = array<i64: 2>, scalar_prefetch = 0 : i64, scratch_operands = 0 : i64, tpu.core_type = #tpu.core_type<tc>, window_params = [{transform_indices = @transform_0, window_bounds = array<i64: 16, 504>}, {pipeline_mode = #tpu.pipeline_mode<synchronous>, transform_indices = @transform_1, window_bounds = array<i64: 504, 512>}, {pipeline_mode = #tpu.pipeline_mode<synchronous>, transform_indices = @transform_2, window_bounds = array<i64: 1, 512>}, {pipeline_mode = #tpu.pipeline_mode<synchronous>, transform_indices = @transform_3, window_bounds = array<i64: 512, 128>}, {pipeline_mode = #tpu.pipeline_mode<synchronous>, transform_indices = @transform_4, window_bounds = array<i64: 1, 128>}, {pipeline_mode = #tpu.pipeline_mode<synchronous>, transform_indices = @transform_5, window_bounds = array<i64: 128, 128>}, {pipeline_mode = #tpu.pipeline_mode<synchronous>, transform_indices = @transform_6, window_bounds = array<i64: 1, 128>}, {pipeline_mode = #tpu.pipeline_mode<synchronous>, transform_indices = @transform_7, window_bounds = array<i64: 128, 128>}, {pipeline_mode = #tpu.pipeline_mode<synchronous>, transform_indices = @transform_8, window_bounds = array<i64: 1, 128>}, {transform_indices = @transform_9, window_bounds = array<i64: 16, 128>}]} {
    %c0 = arith.constant 0 : index
    %c0_0 = arith.constant 0 : index
    %0 = vector.load %arg1[%c0, %c0_0] : memref<16x504xf32, #tpu.memory_space<vmem>>, vector<16x504xf32>
    %1 = arith.truncf %0 : vector<16x504xf32> to vector<16x504xbf16>
    %c0_1 = arith.constant 0 : index
    %c0_2 = arith.constant 0 : index
    %2 = vector.load %arg2[%c0_1, %c0_2] : memref<504x512xbf16, #tpu.memory_space<vmem>>, vector<504x512xbf16>
    %cst = arith.constant dense<0.000000e+00> : vector<16x512xf32>
    %3 = tpu.matmul %1, %2, %cst {dimension_numbers = #tpu.dot_dimension_numbers<[1], [0], [0], [1], [0, 0, 1, 1], [], []>} : vector<16x504xbf16>, vector<504x512xbf16>, vector<16x512xf32> -> vector<16x512xf32>
    %c0_3 = arith.constant 0 : index
    %c0_4 = arith.constant 0 : index
    %4 = vector.load %arg3[%c0_3, %c0_4] : memref<1x512xf32, #tpu.memory_space<vmem>>, vector<1x512xf32>
    %5 = vector.broadcast %4 : vector<1x512xf32> to vector<16x512xf32>
    %6 = arith.addf %3, %5 : vector<16x512xf32>
    %cst_5 = arith.constant 0.000000e+00 : f32
    %7 = vector.broadcast %cst_5 : f32 to vector<16x512xf32>
    %8 = arith.maximumf %6, %7 : vector<16x512xf32>
    %9 = arith.truncf %8 : vector<16x512xf32> to vector<16x512xbf16>
    %c0_6 = arith.constant 0 : index
    %c0_7 = arith.constant 0 : index
    %10 = vector.load %arg4[%c0_6, %c0_7] : memref<512x128xbf16, #tpu.memory_space<vmem>>, vector<512x128xbf16>
    %cst_8 = arith.constant dense<0.000000e+00> : vector<16x128xf32>
    %11 = tpu.matmul %9, %10, %cst_8 {dimension_numbers = #tpu.dot_dimension_numbers<[1], [0], [0], [1], [0, 0, 1, 1], [], []>} : vector<16x512xbf16>, vector<512x128xbf16>, vector<16x128xf32> -> vector<16x128xf32>
    %c0_9 = arith.constant 0 : index
    %c0_10 = arith.constant 0 : index
    %12 = vector.load %arg5[%c0_9, %c0_10] : memref<1x128xf32, #tpu.memory_space<vmem>>, vector<1x128xf32>
    %13 = vector.broadcast %12 : vector<1x128xf32> to vector<16x128xf32>
    %14 = arith.addf %11, %13 : vector<16x128xf32>
    %cst_11 = arith.constant 0.000000e+00 : f32
    %15 = vector.broadcast %cst_11 : f32 to vector<16x128xf32>
    %16 = arith.maximumf %14, %15 : vector<16x128xf32>
    %17 = arith.truncf %16 : vector<16x128xf32> to vector<16x128xbf16>
    %c0_12 = arith.constant 0 : index
    %c0_13 = arith.constant 0 : index
    %18 = vector.load %arg6[%c0_12, %c0_13] : memref<128x128xbf16, #tpu.memory_space<vmem>>, vector<128x128xbf16>
    %cst_14 = arith.constant dense<0.000000e+00> : vector<16x128xf32>
    %19 = tpu.matmul %17, %18, %cst_14 {dimension_numbers = #tpu.dot_dimension_numbers<[1], [0], [0], [1], [0, 0, 1, 1], [], []>} : vector<16x128xbf16>, vector<128x128xbf16>, vector<16x128xf32> -> vector<16x128xf32>
    %c0_15 = arith.constant 0 : index
    %c0_16 = arith.constant 0 : index
    %20 = vector.load %arg7[%c0_15, %c0_16] : memref<1x128xf32, #tpu.memory_space<vmem>>, vector<1x128xf32>
    %21 = vector.broadcast %20 : vector<1x128xf32> to vector<16x128xf32>
    %22 = arith.addf %19, %21 : vector<16x128xf32>
    %cst_17 = arith.constant 0.000000e+00 : f32
    %23 = vector.broadcast %cst_17 : f32 to vector<16x128xf32>
    %24 = arith.maximumf %22, %23 : vector<16x128xf32>
    %25 = arith.truncf %24 : vector<16x128xf32> to vector<16x128xbf16>
    %c0_18 = arith.constant 0 : index
    %c0_19 = arith.constant 0 : index
    %26 = vector.load %arg8[%c0_18, %c0_19] : memref<128x128xbf16, #tpu.memory_space<vmem>>, vector<128x128xbf16>
    %cst_20 = arith.constant dense<0.000000e+00> : vector<16x128xf32>
    %27 = tpu.matmul %25, %26, %cst_20 {dimension_numbers = #tpu.dot_dimension_numbers<[1], [0], [0], [1], [0, 0, 1, 1], [], []>} : vector<16x128xbf16>, vector<128x128xbf16>, vector<16x128xf32> -> vector<16x128xf32>
    %c0_21 = arith.constant 0 : index
    %c0_22 = arith.constant 0 : index
    %28 = vector.load %arg9[%c0_21, %c0_22] : memref<1x128xf32, #tpu.memory_space<vmem>>, vector<1x128xf32>
    %29 = vector.broadcast %28 : vector<1x128xf32> to vector<16x128xf32>
    %30 = arith.addf %27, %29 : vector<16x128xf32>
    %31 = arith.truncf %30 : vector<16x128xf32> to vector<16x128xbf16>
    %c0_23 = arith.constant 0 : index
    %c0_24 = arith.constant 0 : index
    %32 = vector.load %arg10[%c0_23, %c0_24] : memref<16x128xbf16, #tpu.memory_space<vmem>>, vector<16x128xbf16>
    tpu.vector_store %arg10[%c0_23, %c0_24], %31 {strides = array<i32>} : memref<16x128xbf16, #tpu.memory_space<vmem>>, vector<16x128xbf16>,
    return
  }
  func.func @transform_0(%arg0: i32) -> (i32, i32) {
    %c0_i32 = arith.constant 0 : i32
    %c0_i32_0 = arith.constant 0 : i32
    return %arg0, %c0_i32 : i32, i32
  }
  func.func @transform_1(%arg0: i32) -> (i32, i32) {
    %c0_i32 = arith.constant 0 : i32
    %c0_i32_0 = arith.constant 0 : i32
    %c0_i32_1 = arith.constant 0 : i32
    return %c0_i32, %c0_i32_0 : i32, i32
  }
  func.func @transform_2(%arg0: i32) -> (i32, i32) {
    %c0_i32 = arith.constant 0 : i32
    %c0_i32_0 = arith.constant 0 : i32
    %c0_i32_1 = arith.constant 0 : i32
    return %c0_i32, %c0_i32_0 : i32, i32
  }
  func.func @transform_3(%arg0: i32) -> (i32, i32) {
    %c0_i32 = arith.constant 0 : i32
    %c0_i32_0 = arith.constant 0 : i32
    %c0_i32_1 = arith.constant 0 : i32
    return %c0_i32, %c0_i32_0 : i32, i32
  }
  func.func @transform_4(%arg0: i32) -> (i32, i32) {
    %c0_i32 = arith.constant 0 : i32
    %c0_i32_0 = arith.constant 0 : i32
    %c0_i32_1 = arith.constant 0 : i32
    return %c0_i32, %c0_i32_0 : i32, i32
  }
  func.func @transform_5(%arg0: i32) -> (i32, i32) {
    %c0_i32 = arith.constant 0 : i32
    %c0_i32_0 = arith.constant 0 : i32
    %c0_i32_1 = arith.constant 0 : i32
    return %c0_i32, %c0_i32_0 : i32, i32
  }
  func.func @transform_6(%arg0: i32) -> (i32, i32) {
    %c0_i32 = arith.constant 0 : i32
    %c0_i32_0 = arith.constant 0 : i32
    %c0_i32_1 = arith.constant 0 : i32
    return %c0_i32, %c0_i32_0 : i32, i32
  }
  func.func @transform_7(%arg0: i32) -> (i32, i32) {
    %c0_i32 = arith.constant 0 : i32
    %c0_i32_0 = arith.constant 0 : i32
    %c0_i32_1 = arith.constant 0 : i32
    return %c0_i32, %c0_i32_0 : i32, i32
  }
  func.func @transform_8(%arg0: i32) -> (i32, i32) {
    %c0_i32 = arith.constant 0 : i32
    %c0_i32_0 = arith.constant 0 : i32
    %c0_i32_1 = arith.constant 0 : i32
    return %c0_i32, %c0_i32_0 : i32, i32
  }
  func.func @transform_9(%arg0: i32) -> (i32, i32) {
    %c0_i32 = arith.constant 0 : i32
    %c0_i32_0 = arith.constant 0 : i32
    return %arg0, %c0_i32 : i32, i32
  }
}

</mosaic_0001>

<llo_original>
// kernel: tpu_custom_call.1
$region0: #{tpu_custom_call.1}
  #allocation0 [shape = 'u32[]', space=smem, size = 0x4, offset = 0x4, fixed_abs, tag = 'smem constant byte address 0x4 - core index']
  #allocation1 [shape = 'u32[72,128]{1,0:T(1,128)}', space=vmem, size = 0x9000, scoped, tag = 'internal scratch']
  %s0 = inlined_call_operand.hbm [shape: f32[32,504], index: 0, kind: input, shape index: {}]
  %s1 = inlined_call_operand.hbm [shape: bf16[504,512], index: 1, kind: input, shape index: {}]
  %s2 = inlined_call_operand.hbm [shape: f32[1,512], index: 2, kind: input, shape index: {}]
  %s3 = inlined_call_operand.hbm [shape: bf16[512,128], index: 3, kind: input, shape index: {}]
  %s4 = inlined_call_operand.vmem [shape: f32[1,128], index: 4, kind: input, shape index: {}]
  %s5 = inlined_call_operand.hbm [shape: bf16[128,128], index: 5, kind: input, shape index: {}]
  %s6 = inlined_call_operand.vmem [shape: f32[1,128], index: 6, kind: input, shape index: {}]
  %s7 = inlined_call_operand.hbm [shape: bf16[128,128], index: 7, kind: input, shape index: {}]
  %s8 = inlined_call_operand.vmem [shape: f32[1,128], index: 8, kind: input, shape index: {}]
  %s9 = inlined_call_operand.hbm [shape: bf16[32,128], index: 9, kind: output, shape index: {}]
  %s10 = sld [smem:[#allocation0]]
  $region93: #{tpu_custom_call.1} parent=0
    _
  %s12 = ssub.s32 1, %s10
  %s13 = scalar_select 0, %s12, %s10
  $region1: #{tpu_custom_call.1} parent=0
    #allocation2 [shape = 'u8[65536]{0}', space=vmem, size = 0x10000, scoped, tag = 'input window, operand 0']
    #allocation3 [shape = 's32[2]{0}', space=sflag, size = 0x8, scoped, tag = 'scoped memory for tpu_custom_call.1']
    #allocation4 [shape = 's32[2]{0}', space=sflag, size = 0x8, scoped, tag = 'scoped memory for tpu_custom_call.1']
    #allocation5 [shape = 'u8[516096]{0}', space=vmem, size = 0x7e000, scoped, tag = 'input window, operand 1, single buffered']
    #allocation6 [shape = 's32[1]{0}', space=sflag, size = 0x4, scoped, tag = 'scoped memory for tpu_custom_call.1']
    #allocation7 [shape = 'u8[2048]{0}', space=vmem, size = 0x800, scoped, tag = 'input window, operand 2, single buffered']
    #allocation8 [shape = 'u8[131072]{0}', space=vmem, size = 0x20000, scoped, tag = 'input window, operand 3, single buffered']
    #allocation9 [shape = 's32[1]{0}', space=sflag, size = 0x4, scoped, tag = 'scoped memory for tpu_custom_call.1']
    #allocation10 [shape = 'u8[32768]{0}', space=vmem, size = 0x8000, scoped, tag = 'input window, operand 5, single buffered']
    #allocation11 [shape = 'u8[32768]{0}', space=vmem, size = 0x8000, scoped, tag = 'input window, operand 7, single buffered']
    #allocation12 [shape = 's32[1]{0}', space=sflag, size = 0x4, scoped, tag = 'scoped memory for tpu_custom_call.1']
    #allocation13 [shape = 'u8[8192]{0}', space=vmem, size = 0x2000, scoped, tag = 'output window, operand 0']
    %14 = vsyncpa [#allocation3], 0
    %s15 = scalar_lea.sflag [#allocation3], 1
    %16 = vsyncpa %s15, 0
    %17 = vsyncpa [#allocation6], 0
    %18 = vsyncpa [#allocation9], 0
    %19 = vsyncpa [#allocation12], 0
    %20 = vsyncpa [#allocation4], 0
    %s21 = scalar_lea.sflag [#allocation4], 1
    %22 = vsyncpa %s21, 0
    loop: start=0, step=1, limit=4
    $region2: #{tpu_custom_call.1} parent=1 // loop_pre_header
      _
    $region3: #{tpu_custom_call.1} parent=1 // loop_header
      %s24 = sphi 0, %s28
      %p25 = scmp.ge.s32.totalorder %s24, 4
      %s34 = sphi 0, %s36
      %s37 = sphi 0, %s34
      %s38 = sphi 0, %s37
      %s54 = sphi 0, %s38
      %s58 = sphi 0, %s58
      %s60 = sphi 0, %s58
      %s61 = sphi 0, %s60
      %s75 = sphi 0, %s61
      %s79 = sphi 0, %s79
      %s81 = sphi 0, %s79
      %s82 = sphi 0, %s81
      %s96 = sphi 0, %s82
      %s100 = sphi 0, %s100
      %s102 = sphi 0, %s100
      %s103 = sphi 0, %s102
      %s117 = sphi 0, %s103
      %s121 = sphi 0, %s121
      %s123 = sphi 0, %s121
      %s124 = sphi 0, %s123
      %s138 = sphi 0, %s124
      %s142 = sphi 0, %s142
      %s144 = sphi 0, %s142
      %s145 = sphi 0, %s144
      %s159 = sphi 0, %s145
      %s163 = sphi 0, %s163
      %s165 = sphi 0, %s163
      %s166 = sphi 0, %s165
      %s180 = sphi 0, %s166
      %s184 = sphi 0, %s184
      %s186 = sphi 0, %s184
      %s187 = sphi 0, %s186
      %s201 = sphi 0, %s187
      %s205 = sphi 0, %s205
      %s207 = sphi 0, %s205
      %s208 = sphi 0, %s207
      %s222 = sphi 0, %s208
      %s228 = sphi 0, %s230
      %s231 = sphi 0, %s228
      %s232 = sphi 0, %s231
      %s248 = sphi 0, %s232
    $region4: #{tpu_custom_call.1} parent=1 // loop_header_branch
      %27 = sbr.rel (%p25) target = $region8
    $region5: #{tpu_custom_call.1} parent=1 // loop_body
      %s29 = ssub.s32 %s24, 1
      %s30 = ssub.s32 %s24, 2
      %s31 = sadd.s32 %s24, 1
      %s32 = ssub.s32 %s24, %s31
      %p33 = scmp.eq.s32.totalorder %s32, 0
      %s35 = sadd.s32 %s34, 1
      %s36 = scalar_select %p33, %s34, %s35
      %p39 = pneg %p33
      %p40 = scmp.eq.s32.totalorder %s24, 1
      %p41 = por %p39, %p40
      %p42 = scmp.ne.s32.totalorder %s34, %s37
      %p43 = scmp.eq.s32.totalorder %s24, 0
      %p44 = por %p42, %p43
      %p45 = scmp.ne.s32.totalorder %s34, %s37
      %p46 = scmp.eq.s32.totalorder %s29, 1
      %p47 = por %p45, %p46
      %p48 = scmp.ne.s32.totalorder %s37, %s38
      %p49 = scmp.eq.s32.totalorder %s29, 0
      %p50 = por %p48, %p49
      %p51 = scmp.ne.s32.totalorder %s37, %s38
      %p52 = scmp.eq.s32.totalorder %s30, 1
      %p53 = por %p51, %p52
      %p55 = scmp.ne.s32.totalorder %s38, %s54
      %p56 = scmp.eq.s32.totalorder %s30, 0
      %p57 = por %p55, %p56
      %s59 = sadd.s32 %s58, 1
      %p62 = scmp.eq.s32.totalorder %s24, 1
      %p63 = scmp.ne.s32.totalorder %s58, %s60
      %p64 = scmp.eq.s32.totalorder %s24, 0
      %p65 = por %p63, %p64
      %p66 = scmp.ne.s32.totalorder %s58, %s60
      %p67 = scmp.eq.s32.totalorder %s29, 1
      %p68 = por %p66, %p67
      %p69 = scmp.ne.s32.totalorder %s60, %s61
      %p70 = scmp.eq.s32.totalorder %s29, 0
      %p71 = por %p69, %p70
      %p72 = scmp.ne.s32.totalorder %s60, %s61
      %p73 = scmp.eq.s32.totalorder %s30, 1
      %p74 = por %p72, %p73
      %p76 = scmp.ne.s32.totalorder %s61, %s75
      %p77 = scmp.eq.s32.totalorder %s30, 0
      %p78 = por %p76, %p77
      %s80 = sadd.s32 %s79, 1
      %p83 = scmp.eq.s32.totalorder %s24, 1
      %p84 = scmp.ne.s32.totalorder %s79, %s81
      %p85 = scmp.eq.s32.totalorder %s24, 0
      %p86 = por %p84, %p85
      %p87 = scmp.ne.s32.totalorder %s79, %s81
      %p88 = scmp.eq.s32.totalorder %s29, 1
      %p89 = por %p87, %p88
      %p90 = scmp.ne.s32.totalorder %s81, %s82
      %p91 = scmp.eq.s32.totalorder %s29, 0
      %p92 = por %p90, %p91
      %p93 = scmp.ne.s32.totalorder %s81, %s82
      %p94 = scmp.eq.s32.totalorder %s30, 1
      %p95 = por %p93, %p94
      %p97 = scmp.ne.s32.totalorder %s82, %s96
      %p98 = scmp.eq.s32.totalorder %s30, 0
      %p99 = por %p97, %p98
      %s101 = sadd.s32 %s100, 1
      %p104 = scmp.eq.s32.totalorder %s24, 1
      %p105 = scmp.ne.s32.totalorder %s100, %s102
      %p106 = scmp.eq.s32.totalorder %s24, 0
      %p107 = por %p105, %p106
      %p108 = scmp.ne.s32.totalorder %s100, %s102
      %p109 = scmp.eq.s32.totalorder %s29, 1
      %p110 = por %p108, %p109
      %p111 = scmp.ne.s32.totalorder %s102, %s103
      %p112 = scmp.eq.s32.totalorder %s29, 0
      %p113 = por %p111, %p112
      %p114 = scmp.ne.s32.totalorder %s102, %s103
      %p115 = scmp.eq.s32.totalorder %s30, 1
      %p116 = por %p114, %p115
      %p118 = scmp.ne.s32.totalorder %s103, %s117
      %p119 = scmp.eq.s32.totalorder %s30, 0
      %p120 = por %p118, %p119
      %s122 = sadd.s32 %s121, 1
      %p125 = scmp.eq.s32.totalorder %s24, 1
      %p126 = scmp.ne.s32.totalorder %s121, %s123
      %p127 = scmp.eq.s32.totalorder %s24, 0
      %p128 = por %p126, %p127
      %p129 = scmp.ne.s32.totalorder %s121, %s123
      %p130 = scmp.eq.s32.totalorder %s29, 1
      %p131 = por %p129, %p130
      %p132 = scmp.ne.s32.totalorder %s123, %s124
      %p133 = scmp.eq.s32.totalorder %s29, 0
      %p134 = por %p132, %p133
      %p135 = scmp.ne.s32.totalorder %s123, %s124
      %p136 = scmp.eq.s32.totalorder %s30, 1
      %p137 = por %p135, %p136
      %p139 = scmp.ne.s32.totalorder %s124, %s138
      %p140 = scmp.eq.s32.totalorder %s30, 0
      %p141 = por %p139, %p140
      %s143 = sadd.s32 %s142, 1
      %p146 = scmp.eq.s32.totalorder %s24, 1
      %p147 = scmp.ne.s32.totalorder %s142, %s144
      %p148 = scmp.eq.s32.totalorder %s24, 0
      %p149 = por %p147, %p148
      %p150 = scmp.ne.s32.totalorder %s142, %s144
      %p151 = scmp.eq.s32.totalorder %s29, 1
      %p152 = por %p150, %p151
      %p153 = scmp.ne.s32.totalorder %s144, %s145
      %p154 = scmp.eq.s32.totalorder %s29, 0
      %p155 = por %p153, %p154
      %p156 = scmp.ne.s32.totalorder %s144, %s145
      %p157 = scmp.eq.s32.totalorder %s30, 1
      %p158 = por %p156, %p157
      %p160 = scmp.ne.s32.totalorder %s145, %s159
      %p161 = scmp.eq.s32.totalorder %s30, 0
      %p162 = por %p160, %p161
      %s164 = sadd.s32 %s163, 1
      %p167 = scmp.eq.s32.totalorder %s24, 1
      %p168 = scmp.ne.s32.totalorder %s163, %s165
      %p169 = scmp.eq.s32.totalorder %s24, 0
      %p170 = por %p168, %p169
      %p171 = scmp.ne.s32.totalorder %s163, %s165
      %p172 = scmp.eq.s32.totalorder %s29, 1
      %p173 = por %p171, %p172
      %p174 = scmp.ne.s32.totalorder %s165, %s166
      %p175 = scmp.eq.s32.totalorder %s29, 0
      %p176 = por %p174, %p175
      %p177 = scmp.ne.s32.totalorder %s165, %s166
      %p178 = scmp.eq.s32.totalorder %s30, 1
      %p179 = por %p177, %p178
      %p181 = scmp.ne.s32.totalorder %s166, %s180
      %p182 = scmp.eq.s32.totalorder %s30, 0
      %p183 = por %p181, %p182
      %s185 = sadd.s32 %s184, 1
      %p188 = scmp.eq.s32.totalorder %s24, 1
      %p189 = scmp.ne.s32.totalorder %s184, %s186
      %p190 = scmp.eq.s32.totalorder %s24, 0
      %p191 = por %p189, %p190
      %p192 = scmp.ne.s32.totalorder %s184, %s186
      %p193 = scmp.eq.s32.totalorder %s29, 1
      %p194 = por %p192, %p193
      %p195 = scmp.ne.s32.totalorder %s186, %s187
      %p196 = scmp.eq.s32.totalorder %s29, 0
      %p197 = por %p195, %p196
      %p198 = scmp.ne.s32.totalorder %s186, %s187
      %p199 = scmp.eq.s32.totalorder %s30, 1
      %p200 = por %p198, %p199
      %p202 = scmp.ne.s32.totalorder %s187, %s201
      %p203 = scmp.eq.s32.totalorder %s30, 0
      %p204 = por %p202, %p203
      %s206 = sadd.s32 %s205, 1
      %p209 = scmp.eq.s32.totalorder %s24, 1
      %p210 = scmp.ne.s32.totalorder %s205, %s207
      %p211 = scmp.eq.s32.totalorder %s24, 0
      %p212 = por %p210, %p211
      %p213 = scmp.ne.s32.totalorder %s205, %s207
      %p214 = scmp.eq.s32.totalorder %s29, 1
      %p215 = por %p213, %p214
      %p216 = scmp.ne.s32.totalorder %s207, %s208
      %p217 = scmp.eq.s32.totalorder %s29, 0
      %p218 = por %p216, %p217
      %p219 = scmp.ne.s32.totalorder %s207, %s208
      %p220 = scmp.eq.s32.totalorder %s30, 1
      %p221 = por %p219, %p220
      %p223 = scmp.ne.s32.totalorder %s208, %s222
      %p224 = scmp.eq.s32.totalorder %s30, 0
      %p225 = por %p223, %p224
      %s226 = ssub.s32 %s24, %s31
      %p227 = scmp.eq.s32.totalorder %s226, 0
      %s229 = sadd.s32 %s228, 1
      %s230 = scalar_select %p227, %s228, %s229
      %p233 = pneg %p227
      %p234 = scmp.eq.s32.totalorder %s24, 1
      %p235 = por %p233, %p234
      %p236 = scmp.ne.s32.totalorder %s228, %s231
      %p237 = scmp.eq.s32.totalorder %s24, 0
      %p238 = por %p236, %p237
      %p239 = scmp.ne.s32.totalorder %s228, %s231
      %p240 = scmp.eq.s32.totalorder %s29, 1
      %p241 = por %p239, %p240
      %p242 = scmp.ne.s32.totalorder %s231, %s232
      %p243 = scmp.eq.s32.totalorder %s29, 0
      %p244 = por %p242, %p243
      %p245 = scmp.ne.s32.totalorder %s231, %s232
      %p246 = scmp.eq.s32.totalorder %s30, 1
      %p247 = por %p245, %p246
      %p249 = scmp.ne.s32.totalorder %s232, %s248
      %p250 = scmp.eq.s32.totalorder %s30, 0
      %p251 = por %p249, %p250
      %p252 = scmp.le.s32.totalorder 1, %s24
      %p253 = scmp.lt.s32.totalorder %s24, 3
      %p254 = pnand %p252, %p253
      %p255 = pneg %p254
      // Predicated region
      $region9: #{tpu_custom_call.1} parent=5 // pred_check
        _
      $region10: #{tpu_custom_call.1} parent=5 // pred_check_branch
        %257 = sbr.rel (%p254) target = $region12
      $region11: #{tpu_custom_call.1} parent=5 // pred_region
        %s258 = ssub.s32 %s24, 1
        // Predicated region
        $region13: #{tpu_custom_call.1} parent=11 // pred_check
          %p259 = pneg %p71
        $region14: #{tpu_custom_call.1} parent=11 // pred_check_branch
          %261 = sbr.rel (%p259) target = $region16
        $region15: #{tpu_custom_call.1} parent=11 // pred_region
          %263 = vsyncadd [#allocation6], 0
          %s264 = sshll.u32 %s1, 4
          %s265 = int_to_ptr.hbm [resolvable:$true] %s264
          %s266 = sshll.u32 [#allocation5], 4
          %s267 = int_to_ptr.vmem [resolvable:$true] %s266
          %272 = dma.hbm_to_vmem [thread:$0]  %s265, 16128, %s267, [#allocation6], 256, 256, 16
        $region16: #{tpu_custom_call.1} parent=11 // pred_fallthru
          _
        // Predicated region
        $region17: #{tpu_custom_call.1} parent=11 // pred_check
          %p273 = pneg %p92
        $region18: #{tpu_custom_call.1} parent=11 // pred_check_branch
          %275 = sbr.rel (%p273) target = $region20
        $region19: #{tpu_custom_call.1} parent=11 // pred_region
          %277 = vsyncadd [#allocation6], 0
          %s279 = sshll.u32 %s2, 4
          %s280 = int_to_ptr.hbm [resolvable:$true] %s279
          %s281 = sshll.u32 [#allocation7], 4
          %s282 = int_to_ptr.vmem [resolvable:$true] %s281
          %284 = dma.hbm_to_vmem [thread:$0]  %s280, 64, %s282, [#allocation6]
        $region20: #{tpu_custom_call.1} parent=11 // pred_fallthru
          _
        // Predicated region
        $region21: #{tpu_custom_call.1} parent=11 // pred_check
          %p285 = pneg %p113
        $region22: #{tpu_custom_call.1} parent=11 // pred_check_branch
          %287 = sbr.rel (%p285) target = $region24
        $region23: #{tpu_custom_call.1} parent=11 // pred_region
          %289 = vsyncadd [#allocation9], 0
          %s290 = sshll.u32 %s3, 4
          %s291 = int_to_ptr.hbm [resolvable:$true] %s290
          %s292 = sshll.u32 [#allocation8], 4
          %s293 = int_to_ptr.vmem [resolvable:$true] %s292
          %298 = dma.hbm_to_vmem [thread:$0]  %s291, 4096, %s293, [#allocation9], 64, 64, 4
        $region24: #{tpu_custom_call.1} parent=11 // pred_fallthru
          _
        // Predicated region
        $region25: #{tpu_custom_call.1} parent=11 // pred_check
          %p299 = pneg %p134
        $region26: #{tpu_custom_call.1} parent=11 // pred_check_branch
          %301 = sbr.rel (%p299) target = $region28
        $region27: #{tpu_custom_call.1} parent=11 // pred_region
          _
        $region28: #{tpu_custom_call.1} parent=11 // pred_fallthru
          _
        // Predicated region
        $region29: #{tpu_custom_call.1} parent=11 // pred_check
          %p302 = pneg %p155
        $region30: #{tpu_custom_call.1} parent=11 // pred_check_branch
          %304 = sbr.rel (%p302) target = $region32
        $region31: #{tpu_custom_call.1} parent=11 // pred_region
          %306 = vsyncadd [#allocation9], 0
          %s307 = sshll.u32 %s5, 4
          %s308 = int_to_ptr.hbm [resolvable:$true] %s307
          %s309 = sshll.u32 [#allocation10], 4
          %s310 = int_to_ptr.vmem [resolvable:$true] %s309
          %315 = dma.hbm_to_vmem [thread:$0]  %s308, 1024, %s310, [#allocation9], 64, 64, 4
        $region32: #{tpu_custom_call.1} parent=11 // pred_fallthru
          _
        // Predicated region
        $region33: #{tpu_custom_call.1} parent=11 // pred_check
          %p316 = pneg %p176
        $region34: #{tpu_custom_call.1} parent=11 // pred_check_branch
          %318 = sbr.rel (%p316) target = $region36
        $region35: #{tpu_custom_call.1} parent=11 // pred_region
          _
        $region36: #{tpu_custom_call.1} parent=11 // pred_fallthru
          _
        // Predicated region
        $region37: #{tpu_custom_call.1} parent=11 // pred_check
          %p319 = pneg %p197
        $region38: #{tpu_custom_call.1} parent=11 // pred_check_branch
          %321 = sbr.rel (%p319) target = $region40
        $region39: #{tpu_custom_call.1} parent=11 // pred_region
          %323 = vsyncadd [#allocation12], 0
          %s324 = sshll.u32 %s7, 4
          %s325 = int_to_ptr.hbm [resolvable:$true] %s324
          %s326 = sshll.u32 [#allocation11], 4
          %s327 = int_to_ptr.vmem [resolvable:$true] %s326
          %332 = dma.hbm_to_vmem [thread:$0]  %s325, 1024, %s327, [#allocation12], 64, 64, 4
        $region40: #{tpu_custom_call.1} parent=11 // pred_fallthru
          _
        // Predicated region
        $region41: #{tpu_custom_call.1} parent=11 // pred_check
          %p333 = pneg %p218
        $region42: #{tpu_custom_call.1} parent=11 // pred_check_branch
          %335 = sbr.rel (%p333) target = $region44
        $region43: #{tpu_custom_call.1} parent=11 // pred_region
          _
        $region44: #{tpu_custom_call.1} parent=11 // pred_fallthru
          _
      $region12: #{tpu_custom_call.1} parent=5 // pred_fallthru
        _
      %p336 = scmp.lt.s32.totalorder %s24, 2
      // Predicated region
      $region45: #{tpu_custom_call.1} parent=5 // pred_check
        %p337 = pneg %p336
      $region46: #{tpu_custom_call.1} parent=5 // pred_check_branch
        %339 = sbr.rel (%p337) target = $region48
      $region47: #{tpu_custom_call.1} parent=5 // pred_region
        // Predicated region
        $region49: #{tpu_custom_call.1} parent=47 // pred_check
          %p340 = pneg %p44
        $region50: #{tpu_custom_call.1} parent=47 // pred_check_branch
          %342 = sbr.rel (%p340) target = $region52
        $region51: #{tpu_custom_call.1} parent=47 // pred_region
          %s343 = sand.u32 %s34, 1
          %s344 = scalar_lea.sflag [#allocation3], %s343
          %s345 = sand.u32 %s34, 1
          %s346 = smul.addr %s345, 64
          %s347 = scalar_lea.vmem [#allocation2], %s346
          %s348 = smul.u32 2, %s24
          %350 = vsyncadd %s344, 0
          %s351 = smul.addr %s348, 4
          %s352 = smul.addr %s351, 8
          %s353 = scalar_lea.hbm %s0, %s352
          %s354 = sshll.u32 %s353, 4
          %s355 = int_to_ptr.hbm [resolvable:$true] %s354
          %s356 = sshll.u32 %s347, 4
          %s357 = int_to_ptr.vmem [resolvable:$true] %s356
          %362 = dma.hbm_to_vmem [thread:$0]  %s355, 1024, %s357, %s344, 512, 512, 32
        $region52: #{tpu_custom_call.1} parent=47 // pred_fallthru
          _
      $region48: #{tpu_custom_call.1} parent=5 // pred_fallthru
        _
      %p363 = scmp.le.s32.totalorder 1, %s24
      %p364 = scmp.lt.s32.totalorder %s24, 3
      %p365 = pnand %p363, %p364
      %p366 = pneg %p365
      // Predicated region
      $region53: #{tpu_custom_call.1} parent=5 // pred_check
        _
      $region54: #{tpu_custom_call.1} parent=5 // pred_check_branch
        %368 = sbr.rel (%p365) target = $region56
      $region55: #{tpu_custom_call.1} parent=5 // pred_region
        %s369 = ssub.s32 %s24, 1
        %s370 = sand.u32 %s37, 1
        %s371 = scalar_lea.sflag [#allocation3], %s370
        %s372 = sand.u32 %s37, 1
        %s373 = smul.addr %s372, 64
        %s374 = scalar_lea.vmem [#allocation2], %s373
        // Predicated region
        $region57: #{tpu_custom_call.1} parent=55 // pred_check
          %p375 = pneg %p50
        $region58: #{tpu_custom_call.1} parent=55 // pred_check_branch
          %377 = sbr.rel (%p375) target = $region60
        $region59: #{tpu_custom_call.1} parent=55 // pred_region
          %379 = dma.done %s371, 1024
        $region60: #{tpu_custom_call.1} parent=55 // pred_fallthru
          _
        // Predicated region
        $region61: #{tpu_custom_call.1} parent=55 // pred_check
          %p380 = pneg %p71
        $region62: #{tpu_custom_call.1} parent=55 // pred_check_branch
          %382 = sbr.rel (%p380) target = $region64
        $region63: #{tpu_custom_call.1} parent=55 // pred_region
          %384 = dma.done [#allocation6], 16128
        $region64: #{tpu_custom_call.1} parent=55 // pred_fallthru
          _
        // Predicated region
        $region65: #{tpu_custom_call.1} parent=55 // pred_check
          %p385 = pneg %p92
        $region66: #{tpu_custom_call.1} parent=55 // pred_check_branch
          %387 = sbr.rel (%p385) target = $region68
        $region67: #{tpu_custom_call.1} parent=55 // pred_region
          %389 = dma.done [#allocation6], 64
        $region68: #{tpu_custom_call.1} parent=55 // pred_fallthru
          _
        // Predicated region
        $region69: #{tpu_custom_call.1} parent=55 // pred_check
          %p390 = pneg %p113
        $region70: #{tpu_custom_call.1} parent=55 // pred_check_branch
          %392 = sbr.rel (%p390) target = $region72
        $region71: #{tpu_custom_call.1} parent=55 // pred_region
          %394 = dma.done [#allocation9], 4096
        $region72: #{tpu_custom_call.1} parent=55 // pred_fallthru
          _
        // Predicated region
        $region73: #{tpu_custom_call.1} parent=55 // pred_check
          %p395 = pneg %p155
        $region74: #{tpu_custom_call.1} parent=55 // pred_check_branch
          %397 = sbr.rel (%p395) target = $region76
        $region75: #{tpu_custom_call.1} parent=55 // pred_region
          %399 = dma.done [#allocation9], 1024
        $region76: #{tpu_custom_call.1} parent=55 // pred_fallthru
          _
        // Predicated region
        $region77: #{tpu_custom_call.1} parent=55 // pred_check
          %p400 = pneg %p197
        $region78: #{tpu_custom_call.1} parent=55 // pred_check_branch
          %402 = sbr.rel (%p400) target = $region80
        $region79: #{tpu_custom_call.1} parent=55 // pred_region
          %404 = dma.done [#allocation12], 1024
        $region80: #{tpu_custom_call.1} parent=55 // pred_fallthru
          _
        %s405 = sand.u32 %s37, 1
        %s406 = scalar_lea.sflag [#allocation3], %s405
        %s407 = sand.u32 %s37, 1
        %s408 = smul.addr %s407, 64
        %s409 = scalar_lea.vmem [#allocation2], %s408
        %p410 = pneg %p50
        %p411 = pneg %p47
        %p412 = pneg %p71
        %p413 = pneg %p68
        %p414 = pneg %p92
        %p415 = pneg %p89
        %p416 = pneg %p113
        %p417 = pneg %p110
        %p418 = pneg %p134
        %p419 = pneg %p131
        %p420 = pneg %p155
        %p421 = pneg %p152
        %p422 = pneg %p176
        %p423 = pneg %p173
        %p424 = pneg %p197
        %p425 = pneg %p194
        %p426 = pneg %p218
        %p427 = pneg %p215
        %p428 = pneg %p244
        %p429 = pneg %p241
        %s430 = sand.u32 %s231, 1
        %s431 = scalar_lea.sflag [#allocation4], %s430
        %s432 = sand.u32 %s231, 1
        %s433 = smul.addr %s432, 8
        %s434 = scalar_lea.vmem [#allocation13], %s433
        %s435 = smul.u32 2, %s29
        %s436 = smul.u32 2, %s29
        %v437 = vld [vmem:[%s374] sm:$0xff]
        %v438 = vld [vmem:[%s374 + $0x8] sm:$0xff]
        %v439 = vld [vmem:[%s374 + $0x10] sm:$0xff]
        %v440 = vld [vmem:[%s374 + $0x18] sm:$0xff]
        %v441 = vld [vmem:[%s374 + $0x20] sm:$0xff]
        %v442 = vld [vmem:[%s374 + $0x28] sm:$0xff]
        %v443 = vld [vmem:[%s374 + $0x30] sm:$0xff]
        %v444 = vld [vmem:[%s374 + $0x38] sm:$0xff]
        %v445 = vpack.c.bf16 %v441, %v437
        %v446 = vpack.c.bf16 %v442, %v438
        %v447 = vpack.c.bf16 %v443, %v439
        %v448 = vpack.c.bf16 %v444, %v440
        %v449 = vld [vmem:[#allocation5] sm:$0xff]
        %v450 = vld [vmem:[#allocation5 + $0x8] sm:$0xff]
        %v451 = vld [vmem:[#allocation5 + $0x10] sm:$0xff]
        %v452 = vld [vmem:[#allocation5 + $0x18] sm:$0xff]
        %v453 = vld [vmem:[#allocation5 + $0x20] sm:$0xff]
        %v454 = vld [vmem:[#allocation5 + $0x28] sm:$0xff]
        %v455 = vld [vmem:[#allocation5 + $0x30] sm:$0xff]
        %v456 = vld [vmem:[#allocation5 + $0x38] sm:$0xff]
        %v457 = vld [vmem:[#allocation5 + $0x40] sm:$0xff]
        %v458 = vld [vmem:[#allocation5 + $0x48] sm:$0xff]
        %v459 = vld [vmem:[#allocation5 + $0x50] sm:$0xff]
        %v460 = vld [vmem:[#allocation5 + $0x58] sm:$0xff]
        %v461 = vld [vmem:[#allocation5 + $0x60] sm:$0xff]
        %v462 = vld [vmem:[#allocation5 + $0x68] sm:$0xff]
        %v463 = vld [vmem:[#allocation5 + $0x70] sm:$0xff]
        %v464 = vld [vmem:[#allocation5 + $0x78] sm:$0xff]
        %v465 = vld [vmem:[#allocation5 + $0x80] sm:$0xff]
        %v466 = vld [vmem:[#allocation5 + $0x88] sm:$0xff]
        %v467 = vld [vmem:[#allocation5 + $0x90] sm:$0xff]
        %v468 = vld [vmem:[#allocation5 + $0x98] sm:$0xff]
        %v469 = vld [vmem:[#allocation5 + $0xa0] sm:$0xff]
        %v470 = vld [vmem:[#allocation5 + $0xa8] sm:$0xff]
        %v471 = vld [vmem:[#allocation5 + $0xb0] sm:$0xff]
        %v472 = vld [vmem:[#allocation5 + $0xb8] sm:$0xff]
        %v473 = vld [vmem:[#allocation5 + $0xc0] sm:$0xff]
        %v474 = vld [vmem:[#allocation5 + $0xc8] sm:$0xff]
        %v475 = vld [vmem:[#allocation5 + $0xd0] sm:$0xff]
        %v476 = vld [vmem:[#allocation5 + $0xd8] sm:$0xff]
        %v477 = vld [vmem:[#allocation5 + $0xe0] sm:$0xff]
        %v478 = vld [vmem:[#allocation5 + $0xe8] sm:$0xff]
        %v479 = vld [vmem:[#allocation5 + $0xf0] sm:$0xff]
        %v480 = vld [vmem:[#allocation5 + $0xf8] sm:$0xff]
        %v481 = vld [vmem:[#allocation5 + $0x100] sm:$0xff]
        %v482 = vld [vmem:[#allocation5 + $0x108] sm:$0xff]
        %v483 = vld [vmem:[#allocation5 + $0x110] sm:$0xff]
        %v484 = vld [vmem:[#allocation5 + $0x118] sm:$0xff]
        %v485 = vld [vmem:[#allocation5 + $0x120] sm:$0xff]
        %v486 = vld [vmem:[#allocation5 + $0x128] sm:$0xff]
        %v487 = vld [vmem:[#allocation5 + $0x130] sm:$0xff]
        %v488 = vld [vmem:[#allocation5 + $0x138] sm:$0xff]
        %v489 = vld [vmem:[#allocation5 + $0x140] sm:$0xff]
        %v490 = vld [vmem:[#allocation5 + $0x148] sm:$0xff]
        %v491 = vld [vmem:[#allocation5 + $0x150] sm:$0xff]
        %v492 = vld [vmem:[#allocation5 + $0x158] sm:$0xff]
        %v493 = vld [vmem:[#allocation5 + $0x160] sm:$0xff]
        %v494 = vld [vmem:[#allocation5 + $0x168] sm:$0xff]
        %v495 = vld [vmem:[#allocation5 + $0x170] sm:$0xff]
        %v496 = vld [vmem:[#allocation5 + $0x178] sm:$0xff]
        %v497 = vld [vmem:[#allocation5 + $0x180] sm:$0xff]
        %v498 = vld [vmem:[#allocation5 + $0x188] sm:$0xff]
        %v499 = vld [vmem:[#allocation5 + $0x190] sm:$0xff]
        %v500 = vld [vmem:[#allocation5 + $0x198] sm:$0xff]
        %v501 = vld [vmem:[#allocation5 + $0x1a0] sm:$0xff]
        %v502 = vld [vmem:[#allocation5 + $0x1a8] sm:$0xff]
        %v503 = vld [vmem:[#allocation5 + $0x1b0] sm:$0xff]
        %v504 = vld [vmem:[#allocation5 + $0x1b8] sm:$0xff]
        %v505 = vld [vmem:[#allocation5 + $0x1c0] sm:$0xff]
        %v506 = vld [vmem:[#allocation5 + $0x1c8] sm:$0xff]
        %v507 = vld [vmem:[#allocation5 + $0x1d0] sm:$0xff]
        %v508 = vld [vmem:[#allocation5 + $0x1d8] sm:$0xff]
        %v509 = vld [vmem:[#allocation5 + $0x1e0] sm:$0xff]
        %v510 = vld [vmem:[#allocation5 + $0x1e8] sm:$0xff]
        %v511 = vld [vmem:[#allocation5 + $0x1f0] sm:$0xff]
        %v512 = vld [vmem:[#allocation5 + $0x1f8] sm:$0xff]
        %v513 = vld [vmem:[#allocation5 + $0x200] sm:$0xff]
        %v514 = vld [vmem:[#allocation5 + $0x208] sm:$0xff]
        %v515 = vld [vmem:[#allocation5 + $0x210] sm:$0xff]
        %v516 = vld [vmem:[#allocation5 + $0x218] sm:$0xff]
        %v517 = vld [vmem:[#allocation5 + $0x220] sm:$0xff]
        %v518 = vld [vmem:[#allocation5 + $0x228] sm:$0xff]
        %v519 = vld [vmem:[#allocation5 + $0x230] sm:$0xff]
        %v520 = vld [vmem:[#allocation5 + $0x238] sm:$0xff]
        %v521 = vld [vmem:[#allocation5 + $0x240] sm:$0xff]
        %v522 = vld [vmem:[#allocation5 + $0x248] sm:$0xff]
        %v523 = vld [vmem:[#allocation5 + $0x250] sm:$0xff]
        %v524 = vld [vmem:[#allocation5 + $0x258] sm:$0xff]
        %v525 = vld [vmem:[#allocation5 + $0x260] sm:$0xff]
        %v526 = vld [vmem:[#allocation5 + $0x268] sm:$0xff]
        %v527 = vld [vmem:[#allocation5 + $0x270] sm:$0xff]
        %v528 = vld [vmem:[#allocation5 + $0x278] sm:$0xff]
        %v529 = vld [vmem:[#allocation5 + $0x280] sm:$0xff]
        %v530 = vld [vmem:[#allocation5 + $0x288] sm:$0xff]
        %v531 = vld [vmem:[#allocation5 + $0x290] sm:$0xff]
        %v532 = vld [vmem:[#allocation5 + $0x298] sm:$0xff]
        %v533 = vld [vmem:[#allocation5 + $0x2a0] sm:$0xff]
        %v534 = vld [vmem:[#allocation5 + $0x2a8] sm:$0xff]
        %v535 = vld [vmem:[#allocation5 + $0x2b0] sm:$0xff]
        %v536 = vld [vmem:[#allocation5 + $0x2b8] sm:$0xff]
        %v537 = vld [vmem:[#allocation5 + $0x2c0] sm:$0xff]
        %v538 = vld [vmem:[#allocation5 + $0x2c8] sm:$0xff]
        %v539 = vld [vmem:[#allocation5 + $0x2d0] sm:$0xff]
        %v540 = vld [vmem:[#allocation5 + $0x2d8] sm:$0xff]
        %v541 = vld [vmem:[#allocation5 + $0x2e0] sm:$0xff]
        %v542 = vld [vmem:[#allocation5 + $0x2e8] sm:$0xff]
        %v543 = vld [vmem:[#allocation5 + $0x2f0] sm:$0xff]
        %v544 = vld [vmem:[#allocation5 + $0x2f8] sm:$0xff]
        %v545 = vld [vmem:[#allocation5 + $0x300] sm:$0xff]
        %v546 = vld [vmem:[#allocation5 + $0x308] sm:$0xff]
        %v547 = vld [vmem:[#allocation5 + $0x310] sm:$0xff]
        %v548 = vld [vmem:[#allocation5 + $0x318] sm:$0xff]
        %v549 = vld [vmem:[#allocation5 + $0x320] sm:$0xff]
        %v550 = vld [vmem:[#allocation5 + $0x328] sm:$0xff]
        %v551 = vld [vmem:[#allocation5 + $0x330] sm:$0xff]
        %v552 = vld [vmem:[#allocation5 + $0x338] sm:$0xff]
        %v553 = vld [vmem:[#allocation5 + $0x340] sm:$0xff]
        %v554 = vld [vmem:[#allocation5 + $0x348] sm:$0xff]
        %v555 = vld [vmem:[#allocation5 + $0x350] sm:$0xff]
        %v556 = vld [vmem:[#allocation5 + $0x358] sm:$0xff]
        %v557 = vld [vmem:[#allocation5 + $0x360] sm:$0xff]
        %v558 = vld [vmem:[#allocation5 + $0x368] sm:$0xff]
        %v559 = vld [vmem:[#allocation5 + $0x370] sm:$0xff]
        %v560 = vld [vmem:[#allocation5 + $0x378] sm:$0xff]
        %v561 = vld [vmem:[#allocation5 + $0x380] sm:$0xff]
        %v562 = vld [vmem:[#allocation5 + $0x388] sm:$0xff]
        %v563 = vld [vmem:[#allocation5 + $0x390] sm:$0xff]
        %v564 = vld [vmem:[#allocation5 + $0x398] sm:$0xff]
        %v565 = vld [vmem:[#allocation5 + $0x3a0] sm:$0xff]
        %v566 = vld [vmem:[#allocation5 + $0x3a8] sm:$0xff]
        %v567 = vld [vmem:[#allocation5 + $0x3b0] sm:$0xff]
        %v568 = vld [vmem:[#allocation5 + $0x3b8] sm:$0xff]
        %v569 = vld [vmem:[#allocation5 + $0x3c0] sm:$0xff]
        %v570 = vld [vmem:[#allocation5 + $0x3c8] sm:$0xff]
        %v571 = vld [vmem:[#allocation5 + $0x3d0] sm:$0xff]
        %v572 = vld [vmem:[#allocation5 + $0x3d8] sm:$0xff]
        %v573 = vld [vmem:[#allocation5 + $0x3e0] sm:$0xff]
        %v574 = vld [vmem:[#allocation5 + $0x3e8] sm:$0xff]
        %v575 = vld [vmem:[#allocation7] sm:$0xf]
        %v577 = vperm.slane %v575, 0
        %v578 = vperm.slane %v575, 1
        %v579 = vperm.slane %v575, 2
        %v580 = vperm.slane %v575, 3
        %v711 = vunpack.c.l.b16 %v449
        %v712 = vunpack.c.h.b16 %v449
        %v713 = vunpack.c.l.b16 %v450
        %v714 = vunpack.c.h.b16 %v450
        %v715 = vunpack.c.l.b16 %v451
        %v716 = vunpack.c.h.b16 %v451
        %v717 = vunpack.c.l.b16 %v452
        %v718 = vunpack.c.h.b16 %v452
        %v719 = vunpack.c.l.b16 %v453
        %v720 = vunpack.c.h.b16 %v453
        %v721 = vunpack.c.l.b16 %v454
        %v722 = vunpack.c.h.b16 %v454
        %v723 = vunpack.c.l.b16 %v455
        %v724 = vunpack.c.h.b16 %v455
        %v725 = vunpack.c.l.b16 %v456
        %v726 = vunpack.c.h.b16 %v456
        %v727 = vunpack.c.l.b16 %v457
        %v728 = vunpack.c.h.b16 %v457
        %v729 = vunpack.c.l.b16 %v458
        %v730 = vunpack.c.h.b16 %v458
        %v731 = vunpack.c.l.b16 %v459
        %v732 = vunpack.c.h.b16 %v459
        %v733 = vunpack.c.l.b16 %v460
        %v734 = vunpack.c.h.b16 %v460
        %v735 = vunpack.c.l.b16 %v461
        %v736 = vunpack.c.h.b16 %v461
        %v737 = vunpack.c.l.b16 %v462
        %v738 = vunpack.c.h.b16 %v462
        %v739 = vunpack.c.l.b16 %v463
        %v740 = vunpack.c.h.b16 %v463
        %v741 = vunpack.c.l.b16 %v464
        %v742 = vunpack.c.h.b16 %v464
        %v743 = vunpack.c.l.b16 %v465
        %v744 = vunpack.c.h.b16 %v465
        %v745 = vunpack.c.l.b16 %v466
        %v746 = vunpack.c.h.b16 %v466
        %v747 = vunpack.c.l.b16 %v467
        %v748 = vunpack.c.h.b16 %v467
        %v749 = vunpack.c.l.b16 %v468
        %v750 = vunpack.c.h.b16 %v468
        %v751 = vunpack.c.l.b16 %v469
        %v752 = vunpack.c.h.b16 %v469
        %v753 = vunpack.c.l.b16 %v470
        %v754 = vunpack.c.h.b16 %v470
        %v755 = vunpack.c.l.b16 %v471
        %v756 = vunpack.c.h.b16 %v471
        %v757 = vunpack.c.l.b16 %v472
        %v758 = vunpack.c.h.b16 %v472
        %v759 = vunpack.c.l.b16 %v473
        %v760 = vunpack.c.h.b16 %v473
        %v761 = vunpack.c.l.b16 %v474
        %v762 = vunpack.c.h.b16 %v474
        %v763 = vunpack.c.l.b16 %v475
        %v764 = vunpack.c.h.b16 %v475
        %v765 = vunpack.c.l.b16 %v476
        %v766 = vunpack.c.h.b16 %v476
        %v767 = vunpack.c.l.b16 %v477
        %v768 = vunpack.c.h.b16 %v477
        %v769 = vunpack.c.l.b16 %v478
        %v770 = vunpack.c.h.b16 %v478
        %v771 = vunpack.c.l.b16 %v479
        %v772 = vunpack.c.h.b16 %v479
        %v773 = vunpack.c.l.b16 %v480
        %v774 = vunpack.c.h.b16 %v480
        %v775 = vunpack.c.l.b16 %v481
        %v776 = vunpack.c.h.b16 %v481
        %v777 = vunpack.c.l.b16 %v482
        %v778 = vunpack.c.h.b16 %v482
        %v779 = vunpack.c.l.b16 %v483
        %v780 = vunpack.c.h.b16 %v483
        %v781 = vunpack.c.l.b16 %v484
        %v782 = vunpack.c.h.b16 %v484
        %v783 = vunpack.c.l.b16 %v485
        %v784 = vunpack.c.h.b16 %v485
        %v785 = vunpack.c.l.b16 %v486
        %v786 = vunpack.c.h.b16 %v486
        %v787 = vunpack.c.l.b16 %v487
        %v788 = vunpack.c.h.b16 %v487
        %v789 = vunpack.c.l.b16 %v488
        %v790 = vunpack.c.h.b16 %v488
        %v791 = vunpack.c.l.b16 %v489
        %v792 = vunpack.c.h.b16 %v489
        %v793 = vunpack.c.l.b16 %v490
        %v794 = vunpack.c.h.b16 %v490
        %v795 = vunpack.c.l.b16 %v491
        %v796 = vunpack.c.h.b16 %v491
        %v797 = vunpack.c.l.b16 %v492
        %v798 = vunpack.c.h.b16 %v492
        %v799 = vunpack.c.l.b16 %v493
        %v800 = vunpack.c.h.b16 %v493
        %v801 = vunpack.c.l.b16 %v494
        %v802 = vunpack.c.h.b16 %v494
        %v803 = vunpack.c.l.b16 %v495
        %v804 = vunpack.c.h.b16 %v495
        %v805 = vunpack.c.l.b16 %v496
        %v806 = vunpack.c.h.b16 %v496
        %v807 = vunpack.c.l.b16 %v497
        %v808 = vunpack.c.h.b16 %v497
        %v809 = vunpack.c.l.b16 %v498
        %v810 = vunpack.c.h.b16 %v498
        %v811 = vunpack.c.l.b16 %v499
        %v812 = vunpack.c.h.b16 %v499
        %v813 = vunpack.c.l.b16 %v500
        %v814 = vunpack.c.h.b16 %v500
        %v815 = vunpack.c.l.b16 %v501
        %v816 = vunpack.c.h.b16 %v501
        %v817 = vunpack.c.l.b16 %v502
        %v818 = vunpack.c.h.b16 %v502
        %v819 = vunpack.c.l.b16 %v503
        %v820 = vunpack.c.h.b16 %v503
        %v821 = vunpack.c.l.b16 %v504
        %v822 = vunpack.c.h.b16 %v504
        %v823 = vunpack.c.l.b16 %v505
        %v824 = vunpack.c.h.b16 %v505
        %v825 = vunpack.c.l.b16 %v506
        %v826 = vunpack.c.h.b16 %v506
        %v827 = vunpack.c.l.b16 %v507
        %v828 = vunpack.c.h.b16 %v507
        %v829 = vunpack.c.l.b16 %v508
        %v830 = vunpack.c.h.b16 %v508
        %v831 = vunpack.c.l.b16 %v509
        %v832 = vunpack.c.h.b16 %v509
        %v833 = vunpack.c.l.b16 %v510
        %v834 = vunpack.c.h.b16 %v510
        %v835 = vunpack.c.l.b16 %v511
        %v836 = vunpack.c.h.b16 %v511
        %v837 = vunpack.c.l.b16 %v512
        %v838 = vunpack.c.h.b16 %v512
        %v839 = vunpack.c.l.b16 %v513
        %v840 = vunpack.c.h.b16 %v513
        %v841 = vunpack.c.l.b16 %v514
        %v842 = vunpack.c.h.b16 %v514
        %v843 = vunpack.c.l.b16 %v515
        %v844 = vunpack.c.h.b16 %v515
        %v845 = vunpack.c.l.b16 %v516
        %v846 = vunpack.c.h.b16 %v516
        %v847 = vunpack.c.l.b16 %v517
        %v848 = vunpack.c.h.b16 %v517
        %v849 = vunpack.c.l.b16 %v518
        %v850 = vunpack.c.h.b16 %v518
        %v851 = vunpack.c.l.b16 %v519
        %v852 = vunpack.c.h.b16 %v519
        %v853 = vunpack.c.l.b16 %v520
        %v854 = vunpack.c.h.b16 %v520
        %v855 = vunpack.c.l.b16 %v521
        %v856 = vunpack.c.h.b16 %v521
        %v857 = vunpack.c.l.b16 %v522
        %v858 = vunpack.c.h.b16 %v522
        %v859 = vunpack.c.l.b16 %v523
        %v860 = vunpack.c.h.b16 %v523
        %v861 = vunpack.c.l.b16 %v524
        %v862 = vunpack.c.h.b16 %v524
        %v863 = vunpack.c.l.b16 %v525
        %v864 = vunpack.c.h.b16 %v525
        %v865 = vunpack.c.l.b16 %v526
        %v866 = vunpack.c.h.b16 %v526
        %v867 = vunpack.c.l.b16 %v527
        %v868 = vunpack.c.h.b16 %v527
        %v869 = vunpack.c.l.b16 %v528
        %v870 = vunpack.c.h.b16 %v528
        %v871 = vunpack.c.l.b16 %v529
        %v872 = vunpack.c.h.b16 %v529
        %v873 = vunpack.c.l.b16 %v530
        %v874 = vunpack.c.h.b16 %v530
        %v875 = vunpack.c.l.b16 %v531
        %v876 = vunpack.c.h.b16 %v531
        %v877 = vunpack.c.l.b16 %v532
        %v878 = vunpack.c.h.b16 %v532
        %v879 = vunpack.c.l.b16 %v533
        %v880 = vunpack.c.h.b16 %v533
        %v881 = vunpack.c.l.b16 %v534
        %v882 = vunpack.c.h.b16 %v534
        %v883 = vunpack.c.l.b16 %v535
        %v884 = vunpack.c.h.b16 %v535
        %v885 = vunpack.c.l.b16 %v536
        %v886 = vunpack.c.h.b16 %v536
        %v887 = vunpack.c.l.b16 %v537
        %v888 = vunpack.c.h.b16 %v537
        %v889 = vunpack.c.l.b16 %v538
        %v890 = vunpack.c.h.b16 %v538
        %v891 = vunpack.c.l.b16 %v539
        %v892 = vunpack.c.h.b16 %v539
        %v893 = vunpack.c.l.b16 %v540
        %v894 = vunpack.c.h.b16 %v540
        %v895 = vunpack.c.l.b16 %v541
        %v896 = vunpack.c.h.b16 %v541
        %v897 = vunpack.c.l.b16 %v542
        %v898 = vunpack.c.h.b16 %v542
        %v899 = vunpack.c.l.b16 %v543
        %v900 = vunpack.c.h.b16 %v543
        %v901 = vunpack.c.l.b16 %v544
        %v902 = vunpack.c.h.b16 %v544
        %v903 = vunpack.c.l.b16 %v545
        %v904 = vunpack.c.h.b16 %v545
        %v905 = vunpack.c.l.b16 %v546
        %v906 = vunpack.c.h.b16 %v546
        %v907 = vunpack.c.l.b16 %v547
        %v908 = vunpack.c.h.b16 %v547
        %v909 = vunpack.c.l.b16 %v548
        %v910 = vunpack.c.h.b16 %v548
        %v911 = vunpack.c.l.b16 %v549
        %v912 = vunpack.c.h.b16 %v549
        %v913 = vunpack.c.l.b16 %v550
        %v914 = vunpack.c.h.b16 %v550
        %v915 = vunpack.c.l.b16 %v551
        %v916 = vunpack.c.h.b16 %v551
        %v917 = vunpack.c.l.b16 %v552
        %v918 = vunpack.c.h.b16 %v552
        %v919 = vunpack.c.l.b16 %v553
        %v920 = vunpack.c.h.b16 %v553
        %v921 = vunpack.c.l.b16 %v554
        %v922 = vunpack.c.h.b16 %v554
        %v923 = vunpack.c.l.b16 %v555
        %v924 = vunpack.c.h.b16 %v555
        %v925 = vunpack.c.l.b16 %v556
        %v926 = vunpack.c.h.b16 %v556
        %v927 = vunpack.c.l.b16 %v557
        %v928 = vunpack.c.h.b16 %v557
        %v929 = vunpack.c.l.b16 %v558
        %v930 = vunpack.c.h.b16 %v558
        %v931 = vunpack.c.l.b16 %v559
        %v932 = vunpack.c.h.b16 %v559
        %v933 = vunpack.c.l.b16 %v560
        %v934 = vunpack.c.h.b16 %v560
        %v935 = vunpack.c.l.b16 %v561
        %v936 = vunpack.c.h.b16 %v561
        %v937 = vunpack.c.l.b16 %v562
        %v938 = vunpack.c.h.b16 %v562
        %v939 = vunpack.c.l.b16 %v563
        %v940 = vunpack.c.h.b16 %v563
        %v941 = vunpack.c.l.b16 %v564
        %v942 = vunpack.c.h.b16 %v564
        %v943 = vunpack.c.l.b16 %v565
        %v944 = vunpack.c.h.b16 %v565
        %v945 = vunpack.c.l.b16 %v566
        %v946 = vunpack.c.h.b16 %v566
        %v947 = vunpack.c.l.b16 %v567
        %v948 = vunpack.c.h.b16 %v567
        %v949 = vunpack.c.l.b16 %v568
        %v950 = vunpack.c.h.b16 %v568
        %v951 = vunpack.c.l.b16 %v569
        %v952 = vunpack.c.h.b16 %v569
        %v953 = vunpack.c.l.b16 %v570
        %v954 = vunpack.c.h.b16 %v570
        %v955 = vunpack.c.l.b16 %v571
        %v956 = vunpack.c.h.b16 %v571
        %v957 = vunpack.c.l.b16 %v572
        %v958 = vunpack.c.h.b16 %v572
        %v959 = vunpack.c.l.b16 %v573
        %v960 = vunpack.c.h.b16 %v573
        %v961 = vunpack.c.l.b16 %v574
        %v962 = vunpack.c.h.b16 %v574
        %v963 = vpack.c.b16 %v715, %v711
        %v964 = vpack.c.b16 %v716, %v712
        %v965 = vpack.c.b16 %v717, %v713
        %v966 = vpack.c.b16 %v718, %v714
        %v967 = vpack.c.b16 %v723, %v719
        %v968 = vpack.c.b16 %v724, %v720
        %v969 = vpack.c.b16 %v725, %v721
        %v970 = vpack.c.b16 %v726, %v722
        %v971 = vpack.c.b16 %v731, %v727
        %v972 = vpack.c.b16 %v732, %v728
        %v973 = vpack.c.b16 %v733, %v729
        %v974 = vpack.c.b16 %v734, %v730
        %v975 = vpack.c.b16 %v739, %v735
        %v976 = vpack.c.b16 %v740, %v736
        %v977 = vpack.c.b16 %v741, %v737
        %v978 = vpack.c.b16 %v742, %v738
        %v979 = vpack.c.b16 %v747, %v743
        %v980 = vpack.c.b16 %v748, %v744
        %v981 = vpack.c.b16 %v749, %v745
        %v982 = vpack.c.b16 %v750, %v746
        %v983 = vpack.c.b16 %v755, %v751
        %v984 = vpack.c.b16 %v756, %v752
        %v985 = vpack.c.b16 %v757, %v753
        %v986 = vpack.c.b16 %v758, %v754
        %v987 = vpack.c.b16 %v763, %v759
        %v988 = vpack.c.b16 %v764, %v760
        %v989 = vpack.c.b16 %v765, %v761
        %v990 = vpack.c.b16 %v766, %v762
        %v991 = vpack.c.b16 %v771, %v767
        %v992 = vpack.c.b16 %v772, %v768
        %v993 = vpack.c.b16 %v773, %v769
        %v994 = vpack.c.b16 %v774, %v770
        %v995 = vpack.c.b16 %v779, %v775
        %v996 = vpack.c.b16 %v780, %v776
        %v997 = vpack.c.b16 %v781, %v777
        %v998 = vpack.c.b16 %v782, %v778
        %v999 = vpack.c.b16 %v787, %v783
        %v1000 = vpack.c.b16 %v788, %v784
        %v1001 = vpack.c.b16 %v789, %v785
        %v1002 = vpack.c.b16 %v790, %v786
        %v1003 = vpack.c.b16 %v795, %v791
        %v1004 = vpack.c.b16 %v796, %v792
        %v1005 = vpack.c.b16 %v797, %v793
        %v1006 = vpack.c.b16 %v798, %v794
        %v1007 = vpack.c.b16 %v803, %v799
        %v1008 = vpack.c.b16 %v804, %v800
        %v1009 = vpack.c.b16 %v805, %v801
        %v1010 = vpack.c.b16 %v806, %v802
        %v1011 = vpack.c.b16 %v811, %v807
        %v1012 = vpack.c.b16 %v812, %v808
        %v1013 = vpack.c.b16 %v813, %v809
        %v1014 = vpack.c.b16 %v814, %v810
        %v1015 = vpack.c.b16 %v819, %v815
        %v1016 = vpack.c.b16 %v820, %v816
        %v1017 = vpack.c.b16 %v821, %v817
        %v1018 = vpack.c.b16 %v822, %v818
        %v1019 = vpack.c.b16 %v827, %v823
        %v1020 = vpack.c.b16 %v828, %v824
        %v1021 = vpack.c.b16 %v829, %v825
        %v1022 = vpack.c.b16 %v830, %v826
        %v1023 = vpack.c.b16 %v835, %v831
        %v1024 = vpack.c.b16 %v836, %v832
        %v1025 = vpack.c.b16 %v837, %v833
        %v1026 = vpack.c.b16 %v838, %v834
        %v1027 = vpack.c.b16 %v843, %v839
        %v1028 = vpack.c.b16 %v844, %v840
        %v1029 = vpack.c.b16 %v845, %v841
        %v1030 = vpack.c.b16 %v846, %v842
        %v1031 = vpack.c.b16 %v851, %v847
        %v1032 = vpack.c.b16 %v852, %v848
        %v1033 = vpack.c.b16 %v853, %v849
        %v1034 = vpack.c.b16 %v854, %v850
        %v1035 = vpack.c.b16 %v859, %v855
        %v1036 = vpack.c.b16 %v860, %v856
        %v1037 = vpack.c.b16 %v861, %v857
        %v1038 = vpack.c.b16 %v862, %v858
        %v1039 = vpack.c.b16 %v867, %v863
        %v1040 = vpack.c.b16 %v868, %v864
        %v1041 = vpack.c.b16 %v869, %v865
        %v1042 = vpack.c.b16 %v870, %v866
        %v1043 = vpack.c.b16 %v875, %v871
        %v1044 = vpack.c.b16 %v876, %v872
        %v1045 = vpack.c.b16 %v877, %v873
        %v1046 = vpack.c.b16 %v878, %v874
        %v1047 = vpack.c.b16 %v883, %v879
        %v1048 = vpack.c.b16 %v884, %v880
        %v1049 = vpack.c.b16 %v885, %v881
        %v1050 = vpack.c.b16 %v886, %v882
        %v1051 = vpack.c.b16 %v891, %v887
        %v1052 = vpack.c.b16 %v892, %v888
        %v1053 = vpack.c.b16 %v893, %v889
        %v1054 = vpack.c.b16 %v894, %v890
        %v1055 = vpack.c.b16 %v899, %v895
        %v1056 = vpack.c.b16 %v900, %v896
        %v1057 = vpack.c.b16 %v901, %v897
        %v1058 = vpack.c.b16 %v902, %v898
        %v1059 = vpack.c.b16 %v907, %v903
        %v1060 = vpack.c.b16 %v908, %v904
        %v1061 = vpack.c.b16 %v909, %v905
        %v1062 = vpack.c.b16 %v910, %v906
        %v1063 = vpack.c.b16 %v915, %v911
        %v1064 = vpack.c.b16 %v916, %v912
        %v1065 = vpack.c.b16 %v917, %v913
        %v1066 = vpack.c.b16 %v918, %v914
        %v1067 = vpack.c.b16 %v923, %v919
        %v1068 = vpack.c.b16 %v924, %v920
        %v1069 = vpack.c.b16 %v925, %v921
        %v1070 = vpack.c.b16 %v926, %v922
        %v1071 = vpack.c.b16 %v931, %v927
        %v1072 = vpack.c.b16 %v932, %v928
        %v1073 = vpack.c.b16 %v933, %v929
        %v1074 = vpack.c.b16 %v934, %v930
        %v1075 = vpack.c.b16 %v939, %v935
        %v1076 = vpack.c.b16 %v940, %v936
        %v1077 = vpack.c.b16 %v941, %v937
        %v1078 = vpack.c.b16 %v942, %v938
        %v1079 = vpack.c.b16 %v947, %v943
        %v1080 = vpack.c.b16 %v948, %v944
        %v1081 = vpack.c.b16 %v949, %v945
        %v1082 = vpack.c.b16 %v950, %v946
        %v1083 = vpack.c.b16 %v955, %v951
        %v1084 = vpack.c.b16 %v956, %v952
        %v1085 = vpack.c.b16 %v957, %v953
        %v1086 = vpack.c.b16 %v958, %v954
        %v1087 = vpack.c.b16 %v959, %v959
        %v1088 = vpack.c.b16 %v960, %v960
        %v1089 = vpack.c.b16 %v961, %v961
        %v1090 = vpack.c.b16 %v962, %v962
        %vm1215 = vcmask 982016
        %v1217 = vsel %vm1215, %v448, 0
        %vm1219 = vcmask 1043456
        %v1221 = vsel %vm1219, %v1087, 0
        %v1224 = vsel %vm1219, %v1088, 0
        %v1227 = vsel %vm1219, %v1089, 0
        %v1230 = vsel %vm1219, %v1090, 0
        %1232 = vmatpush.bf16.msra.mxu0 %v991
        %1233 = vmatpush.bf16.msra.mxu0 %v987
        %1234 = vmatpush.bf16.msra.mxu0 %v983
        %1235 = vmatpush.bf16.msra.mxu0 %v979
        %1236 = vmatpush.bf16.msra.mxu0 %v975
        %1237 = vmatpush.bf16.msra.mxu0 %v971
        %1238 = vmatpush.bf16.msra.mxu0 %v967
        %1239 = vmatpush.bf16.msra.mxu0 %v963
        %1240 = vmatmul.bf16.gmra.mxu0 %v445
        %v1241 = vpop.f32.mrf.mxu0
        %v1242 = vadd.f32 %v577, %v1241
        %v1243 = vpop.f32.mrf.mxu0
        %v1244 = vadd.f32 %v577, %v1243
        %1245 = vdwg.mxu0
        %1246 = vmatpush.bf16.msra.mxu0 %v1023
        %1247 = vmatpush.bf16.msra.mxu0 %v1019
        %1248 = vmatpush.bf16.msra.mxu0 %v1015
        %1249 = vmatpush.bf16.msra.mxu0 %v1011
        %1250 = vmatpush.bf16.msra.mxu0 %v1007
        %1251 = vmatpush.bf16.msra.mxu0 %v1003
        %1252 = vmatpush.bf16.msra.mxu0 %v999
        %1253 = vmatpush.bf16.msra.mxu0 %v995
        %1254 = vmatmul.bf16.gmra.mxu0 %v446
        %v1255 = vpop.f32.mrf.mxu0
        %v1256 = vadd.f32 %v1242, %v1255
        %v1257 = vpop.f32.mrf.mxu0
        %v1258 = vadd.f32 %v1244, %v1257
        %1259 = vdwg.mxu0
        %1260 = vmatpush.bf16.msra.mxu0 %v1055
        %1261 = vmatpush.bf16.msra.mxu0 %v1051
        %1262 = vmatpush.bf16.msra.mxu0 %v1047
        %1263 = vmatpush.bf16.msra.mxu0 %v1043
        %1264 = vmatpush.bf16.msra.mxu0 %v1039
        %1265 = vmatpush.bf16.msra.mxu0 %v1035
        %1266 = vmatpush.bf16.msra.mxu0 %v1031
        %1267 = vmatpush.bf16.msra.mxu0 %v1027
        %1268 = vmatmul.bf16.gmra.mxu0 %v447
        %v1269 = vpop.f32.mrf.mxu0
        %v1270 = vadd.f32 %v1256, %v1269
        %v1271 = vpop.f32.mrf.mxu0
        %v1272 = vadd.f32 %v1258, %v1271
        %1273 = vdwg.mxu0
        %1274 = vmatpush.bf16.msra.mxu0 %v1221
        %1275 = vmatpush.bf16.msra.mxu0 %v1083
        %1276 = vmatpush.bf16.msra.mxu0 %v1079
        %1277 = vmatpush.bf16.msra.mxu0 %v1075
        %1278 = vmatpush.bf16.msra.mxu0 %v1071
        %1279 = vmatpush.bf16.msra.mxu0 %v1067
        %1280 = vmatpush.bf16.msra.mxu0 %v1063
        %1281 = vmatpush.bf16.msra.mxu0 %v1059
        %1282 = vmatmul.bf16.gmra.mxu0 %v1217
        %v1283 = vpop.f32.mrf.mxu0
        %v1284 = vadd.f32 %v1270, %v1283
        %v1285 = vpop.f32.mrf.mxu0
        %v1286 = vadd.f32 %v1272, %v1285
        %1287 = vdwg.mxu0
        %1288 = vmatpush.bf16.msra.mxu0 %v992
        %1289 = vmatpush.bf16.msra.mxu0 %v988
        %1290 = vmatpush.bf16.msra.mxu0 %v984
        %1291 = vmatpush.bf16.msra.mxu0 %v980
        %1292 = vmatpush.bf16.msra.mxu0 %v976
        %1293 = vmatpush.bf16.msra.mxu0 %v972
        %1294 = vmatpush.bf16.msra.mxu0 %v968
        %1295 = vmatpush.bf16.msra.mxu0 %v964
        %1296 = vmatmul.bf16.gmra.mxu0 %v445
        %v1297 = vpop.f32.mrf.mxu0
        %v1298 = vadd.f32 %v578, %v1297
        %v1299 = vpop.f32.mrf.mxu0
        %v1300 = vadd.f32 %v578, %v1299
        %1301 = vdwg.mxu0
        %1302 = vmatpush.bf16.msra.mxu0 %v1024
        %1303 = vmatpush.bf16.msra.mxu0 %v1020
        %1304 = vmatpush.bf16.msra.mxu0 %v1016
        %1305 = vmatpush.bf16.msra.mxu0 %v1012
        %1306 = vmatpush.bf16.msra.mxu0 %v1008
        %1307 = vmatpush.bf16.msra.mxu0 %v1004
        %1308 = vmatpush.bf16.msra.mxu0 %v1000
        %1309 = vmatpush.bf16.msra.mxu0 %v996
        %1310 = vmatmul.bf16.gmra.mxu0 %v446
        %v1311 = vpop.f32.mrf.mxu0
        %v1312 = vadd.f32 %v1298, %v1311
        %v1313 = vpop.f32.mrf.mxu0
        %v1314 = vadd.f32 %v1300, %v1313
        %1315 = vdwg.mxu0
        %1316 = vmatpush.bf16.msra.mxu0 %v1056
        %1317 = vmatpush.bf16.msra.mxu0 %v1052
        %1318 = vmatpush.bf16.msra.mxu0 %v1048
        %1319 = vmatpush.bf16.msra.mxu0 %v1044
        %1320 = vmatpush.bf16.msra.mxu0 %v1040
        %1321 = vmatpush.bf16.msra.mxu0 %v1036
        %1322 = vmatpush.bf16.msra.mxu0 %v1032
        %1323 = vmatpush.bf16.msra.mxu0 %v1028
        %1324 = vmatmul.bf16.gmra.mxu0 %v447
        %v1325 = vpop.f32.mrf.mxu0
        %v1326 = vadd.f32 %v1312, %v1325
        %v1327 = vpop.f32.mrf.mxu0
        %v1328 = vadd.f32 %v1314, %v1327
        %1329 = vdwg.mxu0
        %1330 = vmatpush.bf16.msra.mxu0 %v1224
        %1331 = vmatpush.bf16.msra.mxu0 %v1084
        %1332 = vmatpush.bf16.msra.mxu0 %v1080
        %1333 = vmatpush.bf16.msra.mxu0 %v1076
        %1334 = vmatpush.bf16.msra.mxu0 %v1072
        %1335 = vmatpush.bf16.msra.mxu0 %v1068
        %1336 = vmatpush.bf16.msra.mxu0 %v1064
        %1337 = vmatpush.bf16.msra.mxu0 %v1060
        %1338 = vmatmul.bf16.gmra.mxu0 %v1217
        %v1339 = vpop.f32.mrf.mxu0
        %v1340 = vadd.f32 %v1326, %v1339
        %v1341 = vpop.f32.mrf.mxu0
        %v1342 = vadd.f32 %v1328, %v1341
        %1343 = vdwg.mxu0
        %1344 = vmatpush.bf16.msra.mxu0 %v993
        %1345 = vmatpush.bf16.msra.mxu0 %v989
        %1346 = vmatpush.bf16.msra.mxu0 %v985
        %1347 = vmatpush.bf16.msra.mxu0 %v981
        %1348 = vmatpush.bf16.msra.mxu0 %v977
        %1349 = vmatpush.bf16.msra.mxu0 %v973
        %1350 = vmatpush.bf16.msra.mxu0 %v969
        %1351 = vmatpush.bf16.msra.mxu0 %v965
        %1352 = vmatmul.bf16.gmra.mxu0 %v445
        %v1353 = vpop.f32.mrf.mxu0
        %v1354 = vadd.f32 %v579, %v1353
        %v1355 = vpop.f32.mrf.mxu0
        %v1356 = vadd.f32 %v579, %v1355
        %1357 = vdwg.mxu0
        %1358 = vmatpush.bf16.msra.mxu0 %v1025
        %1359 = vmatpush.bf16.msra.mxu0 %v1021
        %1360 = vmatpush.bf16.msra.mxu0 %v1017
        %1361 = vmatpush.bf16.msra.mxu0 %v1013
        %1362 = vmatpush.bf16.msra.mxu0 %v1009
        %1363 = vmatpush.bf16.msra.mxu0 %v1005
        %1364 = vmatpush.bf16.msra.mxu0 %v1001
        %1365 = vmatpush.bf16.msra.mxu0 %v997
        %1366 = vmatmul.bf16.gmra.mxu0 %v446
        %v1367 = vpop.f32.mrf.mxu0
        %v1368 = vadd.f32 %v1354, %v1367
        %v1369 = vpop.f32.mrf.mxu0
        %v1370 = vadd.f32 %v1356, %v1369
        %1371 = vdwg.mxu0
        %1372 = vmatpush.bf16.msra.mxu0 %v1057
        %1373 = vmatpush.bf16.msra.mxu0 %v1053
        %1374 = vmatpush.bf16.msra.mxu0 %v1049
        %1375 = vmatpush.bf16.msra.mxu0 %v1045
        %1376 = vmatpush.bf16.msra.mxu0 %v1041
        %1377 = vmatpush.bf16.msra.mxu0 %v1037
        %1378 = vmatpush.bf16.msra.mxu0 %v1033
        %1379 = vmatpush.bf16.msra.mxu0 %v1029
        %1380 = vmatmul.bf16.gmra.mxu0 %v447
        %v1381 = vpop.f32.mrf.mxu0
        %v1382 = vadd.f32 %v1368, %v1381
        %v1383 = vpop.f32.mrf.mxu0
        %v1384 = vadd.f32 %v1370, %v1383
        %1385 = vdwg.mxu0
        %1386 = vmatpush.bf16.msra.mxu0 %v1227
        %1387 = vmatpush.bf16.msra.mxu0 %v1085
        %1388 = vmatpush.bf16.msra.mxu0 %v1081
        %1389 = vmatpush.bf16.msra.mxu0 %v1077
        %1390 = vmatpush.bf16.msra.mxu0 %v1073
        %1391 = vmatpush.bf16.msra.mxu0 %v1069
        %1392 = vmatpush.bf16.msra.mxu0 %v1065
        %1393 = vmatpush.bf16.msra.mxu0 %v1061
        %1394 = vmatmul.bf16.gmra.mxu0 %v1217
        %v1395 = vpop.f32.mrf.mxu0
        %v1396 = vadd.f32 %v1382, %v1395
        %v1397 = vpop.f32.mrf.mxu0
        %v1398 = vadd.f32 %v1384, %v1397
        %1399 = vdwg.mxu0
        %1400 = vmatpush.bf16.msra.mxu0 %v994
        %1401 = vmatpush.bf16.msra.mxu0 %v990
        %1402 = vmatpush.bf16.msra.mxu0 %v986
        %1403 = vmatpush.bf16.msra.mxu0 %v982
        %1404 = vmatpush.bf16.msra.mxu0 %v978
        %1405 = vmatpush.bf16.msra.mxu0 %v974
        %1406 = vmatpush.bf16.msra.mxu0 %v970
        %1407 = vmatpush.bf16.msra.mxu0 %v966
        %1408 = vmatmul.bf16.gmra.mxu0 %v445
        %v1409 = vpop.f32.mrf.mxu0
        %v1410 = vadd.f32 %v580, %v1409
        %v1411 = vpop.f32.mrf.mxu0
        %v1412 = vadd.f32 %v580, %v1411
        %1413 = vdwg.mxu0
        %1414 = vmatpush.bf16.msra.mxu0 %v1026
        %1415 = vmatpush.bf16.msra.mxu0 %v1022
        %1416 = vmatpush.bf16.msra.mxu0 %v1018
        %1417 = vmatpush.bf16.msra.mxu0 %v1014
        %1418 = vmatpush.bf16.msra.mxu0 %v1010
        %1419 = vmatpush.bf16.msra.mxu0 %v1006
        %1420 = vmatpush.bf16.msra.mxu0 %v1002
        %1421 = vmatpush.bf16.msra.mxu0 %v998
        %1422 = vmatmul.bf16.gmra.mxu0 %v446
        %v1423 = vpop.f32.mrf.mxu0
        %v1424 = vadd.f32 %v1410, %v1423
        %v1425 = vpop.f32.mrf.mxu0
        %v1426 = vadd.f32 %v1412, %v1425
        %1427 = vdwg.mxu0
        %1428 = vmatpush.bf16.msra.mxu0 %v1058
        %1429 = vmatpush.bf16.msra.mxu0 %v1054
        %1430 = vmatpush.bf16.msra.mxu0 %v1050
        %1431 = vmatpush.bf16.msra.mxu0 %v1046
        %1432 = vmatpush.bf16.msra.mxu0 %v1042
        %1433 = vmatpush.bf16.msra.mxu0 %v1038
        %1434 = vmatpush.bf16.msra.mxu0 %v1034
        %1435 = vmatpush.bf16.msra.mxu0 %v1030
        %1436 = vmatmul.bf16.gmra.mxu0 %v447
        %v1437 = vpop.f32.mrf.mxu0
        %v1438 = vadd.f32 %v1424, %v1437
        %v1439 = vpop.f32.mrf.mxu0
        %v1440 = vadd.f32 %v1426, %v1439
        %1441 = vdwg.mxu0
        %1442 = vmatpush.bf16.msra.mxu0 %v1230
        %1443 = vmatpush.bf16.msra.mxu0 %v1086
        %1444 = vmatpush.bf16.msra.mxu0 %v1082
        %1445 = vmatpush.bf16.msra.mxu0 %v1078
        %1446 = vmatpush.bf16.msra.mxu0 %v1074
        %1447 = vmatpush.bf16.msra.mxu0 %v1070
        %1448 = vmatpush.bf16.msra.mxu0 %v1066
        %1449 = vmatpush.bf16.msra.mxu0 %v1062
        %1450 = vmatmul.bf16.gmra.mxu0 %v1217
        %v1451 = vpop.f32.mrf.mxu0
        %v1452 = vadd.f32 %v1438, %v1451
        %v1453 = vpop.f32.mrf.mxu0
        %v1454 = vadd.f32 %v1440, %v1453
        %1455 = vdwg.mxu0
        %v1456 = vmax.f32 %v1284, 0.0
        %v1457 = vmax.f32 %v1340, 0.0
        %v1458 = vmax.f32 %v1396, 0.0
        %v1459 = vmax.f32 %v1452, 0.0
        %v1460 = vmax.f32 %v1286, 0.0
        %v1461 = vmax.f32 %v1342, 0.0
        %v1462 = vmax.f32 %v1398, 0.0
        %v1463 = vmax.f32 %v1454, 0.0
        %v1464 = vpack.c.bf16 %v1460, %v1456
        %v1465 = vpack.c.bf16 %v1461, %v1457
        %v1466 = vpack.c.bf16 %v1462, %v1458
        %v1467 = vpack.c.bf16 %v1463, %v1459
        %v1468 = vld [vmem:[#allocation8] sm:$0xf]
        %v1469 = vld [vmem:[#allocation8 + $0x4] sm:$0xf]
        %v1470 = vld [vmem:[#allocation8 + $0x8] sm:$0xf]
        %v1471 = vld [vmem:[#allocation8 + $0xc] sm:$0xf]
        %v1472 = vld [vmem:[#allocation8 + $0x10] sm:$0xf]
        %v1473 = vld [vmem:[#allocation8 + $0x14] sm:$0xf]
        %v1474 = vld [vmem:[#allocation8 + $0x18] sm:$0xf]
        %v1475 = vld [vmem:[#allocation8 + $0x1c] sm:$0xf]
        %v1476 = vld [vmem:[#allocation8 + $0x20] sm:$0xf]
        %v1477 = vld [vmem:[#allocation8 + $0x24] sm:$0xf]
        %v1478 = vld [vmem:[#allocation8 + $0x28] sm:$0xf]
        %v1479 = vld [vmem:[#allocation8 + $0x2c] sm:$0xf]
        %v1480 = vld [vmem:[#allocation8 + $0x30] sm:$0xf]
        %v1481 = vld [vmem:[#allocation8 + $0x34] sm:$0xf]
        %v1482 = vld [vmem:[#allocation8 + $0x38] sm:$0xf]
        %v1483 = vld [vmem:[#allocation8 + $0x3c] sm:$0xf]
        %v1484 = vld [vmem:[#allocation8 + $0x40] sm:$0xf]
        %v1485 = vld [vmem:[#allocation8 + $0x44] sm:$0xf]
        %v1486 = vld [vmem:[#allocation8 + $0x48] sm:$0xf]
        %v1487 = vld [vmem:[#allocation8 + $0x4c] sm:$0xf]
        %v1488 = vld [vmem:[#allocation8 + $0x50] sm:$0xf]
        %v1489 = vld [vmem:[#allocation8 + $0x54] sm:$0xf]
        %v1490 = vld [vmem:[#allocation8 + $0x58] sm:$0xf]
        %v1491 = vld [vmem:[#allocation8 + $0x5c] sm:$0xf]
        %v1492 = vld [vmem:[#allocation8 + $0x60] sm:$0xf]
        %v1493 = vld [vmem:[#allocation8 + $0x64] sm:$0xf]
        %v1494 = vld [vmem:[#allocation8 + $0x68] sm:$0xf]
        %v1495 = vld [vmem:[#allocation8 + $0x6c] sm:$0xf]
        %v1496 = vld [vmem:[#allocation8 + $0x70] sm:$0xf]
        %v1497 = vld [vmem:[#allocation8 + $0x74] sm:$0xf]
        %v1498 = vld [vmem:[#allocation8 + $0x78] sm:$0xf]
        %v1499 = vld [vmem:[#allocation8 + $0x7c] sm:$0xf]
        %v1500 = vld [vmem:[#allocation8 + $0x80] sm:$0xf]
        %v1501 = vld [vmem:[#allocation8 + $0x84] sm:$0xf]
        %v1502 = vld [vmem:[#allocation8 + $0x88] sm:$0xf]
        %v1503 = vld [vmem:[#allocation8 + $0x8c] sm:$0xf]
        %v1504 = vld [vmem:[#allocation8 + $0x90] sm:$0xf]
        %v1505 = vld [vmem:[#allocation8 + $0x94] sm:$0xf]
        %v1506 = vld [vmem:[#allocation8 + $0x98] sm:$0xf]
        %v1507 = vld [vmem:[#allocation8 + $0x9c] sm:$0xf]
        %v1508 = vld [vmem:[#allocation8 + $0xa0] sm:$0xf]
        %v1509 = vld [vmem:[#allocation8 + $0xa4] sm:$0xf]
        %v1510 = vld [vmem:[#allocation8 + $0xa8] sm:$0xf]
        %v1511 = vld [vmem:[#allocation8 + $0xac] sm:$0xf]
        %v1512 = vld [vmem:[#allocation8 + $0xb0] sm:$0xf]
        %v1513 = vld [vmem:[#allocation8 + $0xb4] sm:$0xf]
        %v1514 = vld [vmem:[#allocation8 + $0xb8] sm:$0xf]
        %v1515 = vld [vmem:[#allocation8 + $0xbc] sm:$0xf]
        %v1516 = vld [vmem:[#allocation8 + $0xc0] sm:$0xf]
        %v1517 = vld [vmem:[#allocation8 + $0xc4] sm:$0xf]
        %v1518 = vld [vmem:[#allocation8 + $0xc8] sm:$0xf]
        %v1519 = vld [vmem:[#allocation8 + $0xcc] sm:$0xf]
        %v1520 = vld [vmem:[#allocation8 + $0xd0] sm:$0xf]
        %v1521 = vld [vmem:[#allocation8 + $0xd4] sm:$0xf]
        %v1522 = vld [vmem:[#allocation8 + $0xd8] sm:$0xf]
        %v1523 = vld [vmem:[#allocation8 + $0xdc] sm:$0xf]
        %v1524 = vld [vmem:[#allocation8 + $0xe0] sm:$0xf]
        %v1525 = vld [vmem:[#allocation8 + $0xe4] sm:$0xf]
        %v1526 = vld [vmem:[#allocation8 + $0xe8] sm:$0xf]
        %v1527 = vld [vmem:[#allocation8 + $0xec] sm:$0xf]
        %v1528 = vld [vmem:[#allocation8 + $0xf0] sm:$0xf]
        %v1529 = vld [vmem:[#allocation8 + $0xf4] sm:$0xf]
        %v1530 = vld [vmem:[#allocation8 + $0xf8] sm:$0xf]
        %v1531 = vld [vmem:[#allocation8 + $0xfc] sm:$0xf]
        %v1532 = vld [vmem:[%s4] sm:$0x1]
        %v1534 = vperm.slane %v1532, 0
        %v1600 = vunpack.c.l.b16 %v1468
        %v1601 = vunpack.c.l.b16 %v1469
        %v1602 = vunpack.c.l.b16 %v1470
        %v1603 = vunpack.c.l.b16 %v1471
        %v1604 = vunpack.c.l.b16 %v1472
        %v1605 = vunpack.c.l.b16 %v1473
        %v1606 = vunpack.c.l.b16 %v1474
        %v1607 = vunpack.c.l.b16 %v1475
        %v1608 = vunpack.c.l.b16 %v1476
        %v1609 = vunpack.c.l.b16 %v1477
        %v1610 = vunpack.c.l.b16 %v1478
        %v1611 = vunpack.c.l.b16 %v1479
        %v1612 = vunpack.c.l.b16 %v1480
        %v1613 = vunpack.c.l.b16 %v1481
        %v1614 = vunpack.c.l.b16 %v1482
        %v1615 = vunpack.c.l.b16 %v1483
        %v1616 = vunpack.c.l.b16 %v1484
        %v1617 = vunpack.c.l.b16 %v1485
        %v1618 = vunpack.c.l.b16 %v1486
        %v1619 = vunpack.c.l.b16 %v1487
        %v1620 = vunpack.c.l.b16 %v1488
        %v1621 = vunpack.c.l.b16 %v1489
        %v1622 = vunpack.c.l.b16 %v1490
        %v1623 = vunpack.c.l.b16 %v1491
        %v1624 = vunpack.c.l.b16 %v1492
        %v1625 = vunpack.c.l.b16 %v1493
        %v1626 = vunpack.c.l.b16 %v1494
        %v1627 = vunpack.c.l.b16 %v1495
        %v1628 = vunpack.c.l.b16 %v1496
        %v1629 = vunpack.c.l.b16 %v1497
        %v1630 = vunpack.c.l.b16 %v1498
        %v1631 = vunpack.c.l.b16 %v1499
        %v1632 = vunpack.c.l.b16 %v1500
        %v1633 = vunpack.c.l.b16 %v1501
        %v1634 = vunpack.c.l.b16 %v1502
        %v1635 = vunpack.c.l.b16 %v1503
        %v1636 = vunpack.c.l.b16 %v1504
        %v1637 = vunpack.c.l.b16 %v1505
        %v1638 = vunpack.c.l.b16 %v1506
        %v1639 = vunpack.c.l.b16 %v1507
        %v1640 = vunpack.c.l.b16 %v1508
        %v1641 = vunpack.c.l.b16 %v1509
        %v1642 = vunpack.c.l.b16 %v1510
        %v1643 = vunpack.c.l.b16 %v1511
        %v1644 = vunpack.c.l.b16 %v1512
        %v1645 = vunpack.c.l.b16 %v1513
        %v1646 = vunpack.c.l.b16 %v1514
        %v1647 = vunpack.c.l.b16 %v1515
        %v1648 = vunpack.c.l.b16 %v1516
        %v1649 = vunpack.c.l.b16 %v1517
        %v1650 = vunpack.c.l.b16 %v1518
        %v1651 = vunpack.c.l.b16 %v1519
        %v1652 = vunpack.c.l.b16 %v1520
        %v1653 = vunpack.c.l.b16 %v1521
        %v1654 = vunpack.c.l.b16 %v1522
        %v1655 = vunpack.c.l.b16 %v1523
        %v1656 = vunpack.c.l.b16 %v1524
        %v1657 = vunpack.c.l.b16 %v1525
        %v1658 = vunpack.c.l.b16 %v1526
        %v1659 = vunpack.c.l.b16 %v1527
        %v1660 = vunpack.c.l.b16 %v1528
        %v1661 = vunpack.c.l.b16 %v1529
        %v1662 = vunpack.c.l.b16 %v1530
        %v1663 = vunpack.c.l.b16 %v1531
        %v1664 = vpack.c.b16 %v1601, %v1600
        %v1665 = vpack.c.b16 %v1603, %v1602
        %v1666 = vpack.c.b16 %v1605, %v1604
        %v1667 = vpack.c.b16 %v1607, %v1606
        %v1668 = vpack.c.b16 %v1609, %v1608
        %v1669 = vpack.c.b16 %v1611, %v1610
        %v1670 = vpack.c.b16 %v1613, %v1612
        %v1671 = vpack.c.b16 %v1615, %v1614
        %v1672 = vpack.c.b16 %v1617, %v1616
        %v1673 = vpack.c.b16 %v1619, %v1618
        %v1674 = vpack.c.b16 %v1621, %v1620
        %v1675 = vpack.c.b16 %v1623, %v1622
        %v1676 = vpack.c.b16 %v1625, %v1624
        %v1677 = vpack.c.b16 %v1627, %v1626
        %v1678 = vpack.c.b16 %v1629, %v1628
        %v1679 = vpack.c.b16 %v1631, %v1630
        %v1680 = vpack.c.b16 %v1633, %v1632
        %v1681 = vpack.c.b16 %v1635, %v1634
        %v1682 = vpack.c.b16 %v1637, %v1636
        %v1683 = vpack.c.b16 %v1639, %v1638
        %v1684 = vpack.c.b16 %v1641, %v1640
        %v1685 = vpack.c.b16 %v1643, %v1642
        %v1686 = vpack.c.b16 %v1645, %v1644
        %v1687 = vpack.c.b16 %v1647, %v1646
        %v1688 = vpack.c.b16 %v1649, %v1648
        %v1689 = vpack.c.b16 %v1651, %v1650
        %v1690 = vpack.c.b16 %v1653, %v1652
        %v1691 = vpack.c.b16 %v1655, %v1654
        %v1692 = vpack.c.b16 %v1657, %v1656
        %v1693 = vpack.c.b16 %v1659, %v1658
        %v1694 = vpack.c.b16 %v1661, %v1660
        %v1695 = vpack.c.b16 %v1663, %v1662
        %1728 = vmatpush.bf16.msra.mxu0 %v1671
        %1729 = vmatpush.bf16.msra.mxu0 %v1670
        %1730 = vmatpush.bf16.msra.mxu0 %v1669
        %1731 = vmatpush.bf16.msra.mxu0 %v1668
        %1732 = vmatpush.bf16.msra.mxu0 %v1667
        %1733 = vmatpush.bf16.msra.mxu0 %v1666
        %1734 = vmatpush.bf16.msra.mxu0 %v1665
        %1735 = vmatpush.bf16.msra.mxu0 %v1664
        %1736 = vmatmul.bf16.gmra.mxu0 %v1464
        %v1737 = vpop.f32.mrf.mxu0
        %v1738 = vadd.f32 %v1534, %v1737
        %v1739 = vpop.f32.mrf.mxu0
        %v1740 = vadd.f32 %v1534, %v1739
        %1741 = vdwg.mxu0
        %1742 = vmatpush.bf16.msra.mxu0 %v1679
        %1743 = vmatpush.bf16.msra.mxu0 %v1678
        %1744 = vmatpush.bf16.msra.mxu0 %v1677
        %1745 = vmatpush.bf16.msra.mxu0 %v1676
        %1746 = vmatpush.bf16.msra.mxu0 %v1675
        %1747 = vmatpush.bf16.msra.mxu0 %v1674
        %1748 = vmatpush.bf16.msra.mxu0 %v1673
        %1749 = vmatpush.bf16.msra.mxu0 %v1672
        %1750 = vmatmul.bf16.gmra.mxu0 %v1465
        %v1751 = vpop.f32.mrf.mxu0
        %v1752 = vadd.f32 %v1738, %v1751
        %v1753 = vpop.f32.mrf.mxu0
        %v1754 = vadd.f32 %v1740, %v1753
        %1755 = vdwg.mxu0
        %1756 = vmatpush.bf16.msra.mxu0 %v1687
        %1757 = vmatpush.bf16.msra.mxu0 %v1686
        %1758 = vmatpush.bf16.msra.mxu0 %v1685
        %1759 = vmatpush.bf16.msra.mxu0 %v1684
        %1760 = vmatpush.bf16.msra.mxu0 %v1683
        %1761 = vmatpush.bf16.msra.mxu0 %v1682
        %1762 = vmatpush.bf16.msra.mxu0 %v1681
        %1763 = vmatpush.bf16.msra.mxu0 %v1680
        %1764 = vmatmul.bf16.gmra.mxu0 %v1466
        %v1765 = vpop.f32.mrf.mxu0
        %v1766 = vadd.f32 %v1752, %v1765
        %v1767 = vpop.f32.mrf.mxu0
        %v1768 = vadd.f32 %v1754, %v1767
        %1769 = vdwg.mxu0
        %1770 = vmatpush.bf16.msra.mxu0 %v1695
        %1771 = vmatpush.bf16.msra.mxu0 %v1694
        %1772 = vmatpush.bf16.msra.mxu0 %v1693
        %1773 = vmatpush.bf16.msra.mxu0 %v1692
        %1774 = vmatpush.bf16.msra.mxu0 %v1691
        %1775 = vmatpush.bf16.msra.mxu0 %v1690
        %1776 = vmatpush.bf16.msra.mxu0 %v1689
        %1777 = vmatpush.bf16.msra.mxu0 %v1688
        %1778 = vmatmul.bf16.gmra.mxu0 %v1467
        %v1779 = vpop.f32.mrf.mxu0
        %v1780 = vadd.f32 %v1766, %v1779
        %v1781 = vpop.f32.mrf.mxu0
        %v1782 = vadd.f32 %v1768, %v1781
        %1783 = vdwg.mxu0
        %v1784 = vmax.f32 %v1780, 0.0
        %v1785 = vmax.f32 %v1782, 0.0
        %v1786 = vpack.c.bf16 %v1785, %v1784
        %v1787 = vld [vmem:[#allocation10] sm:$0xf]
        %v1788 = vld [vmem:[#allocation10 + $0x4] sm:$0xf]
        %v1789 = vld [vmem:[#allocation10 + $0x8] sm:$0xf]
        %v1790 = vld [vmem:[#allocation10 + $0xc] sm:$0xf]
        %v1791 = vld [vmem:[#allocation10 + $0x10] sm:$0xf]
        %v1792 = vld [vmem:[#allocation10 + $0x14] sm:$0xf]
        %v1793 = vld [vmem:[#allocation10 + $0x18] sm:$0xf]
        %v1794 = vld [vmem:[#allocation10 + $0x1c] sm:$0xf]
        %v1795 = vld [vmem:[#allocation10 + $0x20] sm:$0xf]
        %v1796 = vld [vmem:[#allocation10 + $0x24] sm:$0xf]
        %v1797 = vld [vmem:[#allocation10 + $0x28] sm:$0xf]
        %v1798 = vld [vmem:[#allocation10 + $0x2c] sm:$0xf]
        %v1799 = vld [vmem:[#allocation10 + $0x30] sm:$0xf]
        %v1800 = vld [vmem:[#allocation10 + $0x34] sm:$0xf]
        %v1801 = vld [vmem:[#allocation10 + $0x38] sm:$0xf]
        %v1802 = vld [vmem:[#allocation10 + $0x3c] sm:$0xf]
        %v1803 = vld [vmem:[%s6] sm:$0x1]
        %v1805 = vperm.slane %v1803, 0
        %v1823 = vunpack.c.l.b16 %v1787
        %v1824 = vunpack.c.l.b16 %v1788
        %v1825 = vunpack.c.l.b16 %v1789
        %v1826 = vunpack.c.l.b16 %v1790
        %v1827 = vunpack.c.l.b16 %v1791
        %v1828 = vunpack.c.l.b16 %v1792
        %v1829 = vunpack.c.l.b16 %v1793
        %v1830 = vunpack.c.l.b16 %v1794
        %v1831 = vunpack.c.l.b16 %v1795
        %v1832 = vunpack.c.l.b16 %v1796
        %v1833 = vunpack.c.l.b16 %v1797
        %v1834 = vunpack.c.l.b16 %v1798
        %v1835 = vunpack.c.l.b16 %v1799
        %v1836 = vunpack.c.l.b16 %v1800
        %v1837 = vunpack.c.l.b16 %v1801
        %v1838 = vunpack.c.l.b16 %v1802
        %v1839 = vpack.c.b16 %v1824, %v1823
        %v1840 = vpack.c.b16 %v1826, %v1825
        %v1841 = vpack.c.b16 %v1828, %v1827
        %v1842 = vpack.c.b16 %v1830, %v1829
        %v1843 = vpack.c.b16 %v1832, %v1831
        %v1844 = vpack.c.b16 %v1834, %v1833
        %v1845 = vpack.c.b16 %v1836, %v1835
        %v1846 = vpack.c.b16 %v1838, %v1837
        %1855 = vmatpush.bf16.msra.mxu0 %v1846
        %1856 = vmatpush.bf16.msra.mxu0 %v1845
        %1857 = vmatpush.bf16.msra.mxu0 %v1844
        %1858 = vmatpush.bf16.msra.mxu0 %v1843
        %1859 = vmatpush.bf16.msra.mxu0 %v1842
        %1860 = vmatpush.bf16.msra.mxu0 %v1841
        %1861 = vmatpush.bf16.msra.mxu0 %v1840
        %1862 = vmatpush.bf16.msra.mxu0 %v1839
        %1863 = vmatmul.bf16.gmra.mxu0 %v1786
        %v1864 = vpop.f32.mrf.mxu0
        %v1865 = vadd.f32 %v1805, %v1864
        %v1866 = vpop.f32.mrf.mxu0
        %v1867 = vadd.f32 %v1805, %v1866
        %1868 = vdwg.mxu0
        %v1869 = vmax.f32 %v1865, 0.0
        %v1870 = vmax.f32 %v1867, 0.0
        %v1871 = vpack.c.bf16 %v1870, %v1869
        %v1872 = vld [vmem:[#allocation11] sm:$0xf]
        %v1873 = vld [vmem:[#allocation11 + $0x4] sm:$0xf]
        %v1874 = vld [vmem:[#allocation11 + $0x8] sm:$0xf]
        %v1875 = vld [vmem:[#allocation11 + $0xc] sm:$0xf]
        %v1876 = vld [vmem:[#allocation11 + $0x10] sm:$0xf]
        %v1877 = vld [vmem:[#allocation11 + $0x14] sm:$0xf]
        %v1878 = vld [vmem:[#allocation11 + $0x18] sm:$0xf]
        %v1879 = vld [vmem:[#allocation11 + $0x1c] sm:$0xf]
        %v1880 = vld [vmem:[#allocation11 + $0x20] sm:$0xf]
        %v1881 = vld [vmem:[#allocation11 + $0x24] sm:$0xf]
        %v1882 = vld [vmem:[#allocation11 + $0x28] sm:$0xf]
        %v1883 = vld [vmem:[#allocation11 + $0x2c] sm:$0xf]
        %v1884 = vld [vmem:[#allocation11 + $0x30] sm:$0xf]
        %v1885 = vld [vmem:[#allocation11 + $0x34] sm:$0xf]
        %v1886 = vld [vmem:[#allocation11 + $0x38] sm:$0xf]
        %v1887 = vld [vmem:[#allocation11 + $0x3c] sm:$0xf]
        %v1888 = vld [vmem:[%s8] sm:$0x1]
        %v1890 = vperm.slane %v1888, 0
        %v1908 = vunpack.c.l.b16 %v1872
        %v1909 = vunpack.c.l.b16 %v1873
        %v1910 = vunpack.c.l.b16 %v1874
        %v1911 = vunpack.c.l.b16 %v1875
        %v1912 = vunpack.c.l.b16 %v1876
        %v1913 = vunpack.c.l.b16 %v1877
        %v1914 = vunpack.c.l.b16 %v1878
        %v1915 = vunpack.c.l.b16 %v1879
        %v1916 = vunpack.c.l.b16 %v1880
        %v1917 = vunpack.c.l.b16 %v1881
        %v1918 = vunpack.c.l.b16 %v1882
        %v1919 = vunpack.c.l.b16 %v1883
        %v1920 = vunpack.c.l.b16 %v1884
        %v1921 = vunpack.c.l.b16 %v1885
        %v1922 = vunpack.c.l.b16 %v1886
        %v1923 = vunpack.c.l.b16 %v1887
        %v1924 = vpack.c.b16 %v1909, %v1908
        %v1925 = vpack.c.b16 %v1911, %v1910
        %v1926 = vpack.c.b16 %v1913, %v1912
        %v1927 = vpack.c.b16 %v1915, %v1914
        %v1928 = vpack.c.b16 %v1917, %v1916
        %v1929 = vpack.c.b16 %v1919, %v1918
        %v1930 = vpack.c.b16 %v1921, %v1920
        %v1931 = vpack.c.b16 %v1923, %v1922
        %1940 = vmatpush.bf16.msra.mxu0 %v1931
        %1941 = vmatpush.bf16.msra.mxu0 %v1930
        %1942 = vmatpush.bf16.msra.mxu0 %v1929
        %1943 = vmatpush.bf16.msra.mxu0 %v1928
        %1944 = vmatpush.bf16.msra.mxu0 %v1927
        %1945 = vmatpush.bf16.msra.mxu0 %v1926
        %1946 = vmatpush.bf16.msra.mxu0 %v1925
        %1947 = vmatpush.bf16.msra.mxu0 %v1924
        %1948 = vmatmul.bf16.gmra.mxu0 %v1871
        %v1949 = vpop.f32.mrf.mxu0
        %v1950 = vadd.f32 %v1890, %v1949
        %v1951 = vpop.f32.mrf.mxu0
        %v1952 = vadd.f32 %v1890, %v1951
        %1953 = vdwg.mxu0
        %v1954 = vpack.c.bf16 %v1950, %v1950
        %v1955 = vpack.c.bf16 %v1952, %v1952
        %1956 = vst [vmem:[%s434] sm:$0xf] %v1954
        %1957 = vst [vmem:[%s434 + $0x4] sm:$0xf] %v1955
        %s1958 = sand.u32 %s231, 1
        %s1959 = scalar_lea.sflag [#allocation4], %s1958
        %s1960 = sand.u32 %s231, 1
        %s1961 = smul.addr %s1960, 8
        %s1962 = scalar_lea.vmem [#allocation13], %s1961
        // Predicated region
        $region81: #{tpu_custom_call.1} parent=55 // pred_check
          %p1963 = pneg %p241
        $region82: #{tpu_custom_call.1} parent=55 // pred_check_branch
          %1965 = sbr.rel (%p1963) target = $region84
        $region83: #{tpu_custom_call.1} parent=55 // pred_region
          %s1966 = smul.u32 2, %s29
          %1968 = vsyncadd %s1959, 0
          %s1969 = smul.addr %s1966, 4
          %s1970 = scalar_lea.hbm %s9, %s1969
          %s1971 = sshll.u32 %s1962, 4
          %s1972 = int_to_ptr.vmem [resolvable:$true] %s1971
          %s1973 = sshll.u32 %s1970, 4
          %s1974 = int_to_ptr.hbm [resolvable:$true] %s1973
          %1979 = dma.vmem_to_hbm [thread:$0]  %s1972, 128, %s1974, %s1959, 64, 64, 4
        $region84: #{tpu_custom_call.1} parent=55 // pred_fallthru
          _
      $region56: #{tpu_custom_call.1} parent=5 // pred_fallthru
        _
      %p1980 = scmp.le.s32.totalorder 2, %s24
      // Predicated region
      $region85: #{tpu_custom_call.1} parent=5 // pred_check
        %p1981 = pneg %p1980
      $region86: #{tpu_custom_call.1} parent=5 // pred_check_branch
        %1983 = sbr.rel (%p1981) target = $region88
      $region87: #{tpu_custom_call.1} parent=5 // pred_region
        %s1984 = ssub.s32 %s24, 2
        // Predicated region
        $region89: #{tpu_custom_call.1} parent=87 // pred_check
          %p1985 = pneg %p247
        $region90: #{tpu_custom_call.1} parent=87 // pred_check_branch
          %1987 = sbr.rel (%p1985) target = $region92
        $region91: #{tpu_custom_call.1} parent=87 // pred_region
          %s1988 = sand.u32 %s232, 1
          %s1989 = scalar_lea.sflag [#allocation4], %s1988
          %s1990 = sand.u32 %s232, 1
          %s1991 = smul.addr %s1990, 8
          %s1992 = scalar_lea.vmem [#allocation13], %s1991
          %1994 = dma.done %s1989, 128
        $region92: #{tpu_custom_call.1} parent=87 // pred_fallthru
          _
      $region88: #{tpu_custom_call.1} parent=5 // pred_fallthru
        _
    $region6: #{tpu_custom_call.1} parent=1 // loop_footer
      %s28 = sadd.s32 1, %s24
    $region7: #{tpu_custom_call.1} parent=1 // loop_footer_branch
      %23 = sbr.rel target = $region3
    $region8: #{tpu_custom_call.1} parent=1 // loop_exit
      _
    %1995 = vsyncpa [#allocation3], 1
    %s1996 = scalar_lea.sflag [#allocation3], 1
    %1997 = vsyncpa %s1996, 1
    %1998 = vsyncpa [#allocation6], 1
    %1999 = vsyncpa [#allocation9], 1
    %2000 = vsyncpa [#allocation12], 1
    %2001 = vsyncpa [#allocation4], 1
    %s2002 = scalar_lea.sflag [#allocation4], 1
    %2003 = vsyncpa %s2002, 1

</llo_original>
